<compile_context>
chip_gen: v7x
topology: tpu7x:2x2x1
jax: 0.10.0
libtpu: 0.0.40
codegen_flags: <defaults>
</compile_context>

<pallas_src>
import math
import jax
import jax.numpy as jnp
from jax import lax
from jax.experimental import pallas as pl
from jax.experimental.pallas import tpu as pltpu

DROP_P = 0.99  # torch.dropout(attn_weight, 0.99, True)


def _sdpa_dropout_kernel(q_ref, k_ref, v_ref, mask_ref, u_ref, o_ref):
    # q_ref: (H, TQ, D); k_ref/v_ref: (H, S, D); mask_ref: (TQ, S);
    # u_ref: (H, TQ, S) dropout uniforms; o_ref: (TQ, H*D) lane-dense output tile.
    H, TQ, D = q_ref.shape
    scale = jnp.float32(1.0 / math.sqrt(D))
    inv_keep = jnp.float32(1.0 / (1.0 - DROP_P))
    mask = mask_ref[...]  # broadcast over batch and heads

    # TODO(synk): for realistic S the (TQ, S) logits/mask block should be KV-tiled
    # (online-softmax / flash style) to bound VMEM; at S=128 the monolithic block is fine.
    outs = []
    for h in range(H):  # H is small and static -> unrolled
        # Fold the 1/sqrt(D) scale into q (S*D multiplies instead of S*S).
        qh = (q_ref[h] * scale).astype(jnp.bfloat16)
        kh = k_ref[h].astype(jnp.bfloat16)
        # q @ k^T via dot_general contracting the last dims (no explicit transpose),
        # bf16 operands on the MXU, f32 accumulation.
        s = lax.dot_general(
            qh, kh,
            dimension_numbers=(((1,), (1,)), ((), ())),
            preferred_element_type=jnp.float32,
        )                                        # (TQ, S)
        s = s + mask

        # Numerically-stable softmax over keys.
        m = jnp.max(s, axis=-1, keepdims=True)
        p = jnp.exp(s - m)
        denom = jnp.sum(p, axis=-1, keepdims=True)
        # Fold the dropout rescale 1/(1-p) into the (TQ, 1) normalizer.
        inv = inv_keep / denom

        # dropout(p=0.99, train=True): keep with prob 0.01, scale kept values by 100.
        keep = u_ref[h] >= jnp.float32(DROP_P)
        pd = jnp.where(keep, p * inv, 0.0)

        # attn @ v with bf16 operands, f32 accumulation.
        outs.append(
            jnp.dot(pd.astype(jnp.bfloat16), v_ref[h].astype(jnp.bfloat16),
                    preferred_element_type=jnp.float32)
        )                                        # (TQ, D)

    # Single lane-dense (TQ, H*D) store -> unmasked output write-back DMA.
    o_ref[...] = jnp.concatenate(outs, axis=-1).astype(o_ref.dtype)


def attention(query, key, value, attn_mask, dropout_key, *, tq=64):
    """query/key/value: [B, H, S, D]; attn_mask: [1, 1, S, S]. Returns [B, H, S, D]."""
    B, H, S, D = query.shape
    assert attn_mask.shape == (1, 1, S, S)
    tq = min(tq, S)
    assert S % tq == 0 and tq % 8 == 0

    # TODO(synk): dropout randomness is generated host-side with jax.random because
    # pltpu.prng_* has no interpret-mode lowering; an in-kernel hash PRNG would avoid this read.
    uniforms = jax.random.uniform(dropout_key, (B, H, S, S), dtype=jnp.float32)

    grid = (B, S // tq)
    out_flat = pl.pallas_call(
        _sdpa_dropout_kernel,
        out_shape=jax.ShapeDtypeStruct((B, S, H * D), query.dtype),
        grid=grid,
        in_specs=[
            pl.BlockSpec((None, H, tq, D), lambda b, qi: (b, 0, qi, 0)),    # q (query tile)
            pl.BlockSpec((None, H, S, D), lambda b, qi: (b, 0, 0, 0)),      # k (full)
            pl.BlockSpec((None, H, S, D), lambda b, qi: (b, 0, 0, 0)),      # v (full)
            pl.BlockSpec((None, None, tq, S), lambda b, qi: (0, 0, qi, 0)), # mask (bcast B, H)
            pl.BlockSpec((None, H, tq, S), lambda b, qi: (b, 0, qi, 0)),    # dropout uniforms
        ],
        out_specs=pl.BlockSpec((None, tq, H * D), lambda b, qi: (b, qi, 0)),
        compiler_params=pltpu.CompilerParams(
            dimension_semantics=("parallel", "parallel"),
        ),
    )(query, key, value, attn_mask, uniforms)

    # (B, S, H*D) -> (B, H, S, D): layout plumbing done wrapper-side so the kernel's
    # output block stays lane-dense.
    return out_flat.reshape(B, S, H, D).transpose(0, 2, 1, 3)


if __name__ == "__main__":
    # Small shapes consistent with the forward pass: [B, H, S, D]
    B, H, S, D = 1, 2, 128, 64
    root = jax.random.PRNGKey(0)
    kq, kk, kv, km, kd = jax.random.split(root, 5)

    query = jax.random.normal(kq, (B, H, S, D), dtype=jnp.float32)
    key_t = jax.random.normal(kk, (B, H, S, D), dtype=jnp.float32)
    value = jax.random.normal(kv, (B, H, S, D), dtype=jnp.float32)
    attn_mask = jax.random.normal(km, (1, 1, S, S), dtype=jnp.float32)

    out = attention(query, key_t, value, attn_mask, dropout_key=kd)
    out = jax.block_until_ready(out)
    assert out.shape == (B, H, S, D)
    assert bool(jnp.all(jnp.isfinite(out)))
    print("KERNEL_OK")
</pallas_src>

<mosaic_0001>
module attributes {stable_mosaic.version = 11 : i64} {
  func.func @_sdpa_dropout_kernel(%arg0: i32, %arg1: i32, %arg2: memref<1x2x64x64xf32, #tpu.memory_space<vmem>>, %arg3: memref<1x2x128x64xf32, #tpu.memory_space<vmem>>, %arg4: memref<1x2x128x64xf32, #tpu.memory_space<vmem>>, %arg5: memref<1x1x64x128xf32, #tpu.memory_space<vmem>>, %arg6: memref<1x2x64x128xf32, #tpu.memory_space<vmem>>, %arg7: memref<1x64x128xf32, #tpu.memory_space<vmem>>) attributes {dimension_semantics = [#tpu.dimension_semantics<parallel>, #tpu.dimension_semantics<parallel>], iteration_bounds = array<i64: 1, 2>, scalar_prefetch = 0 : i64, scratch_operands = 0 : i64, tpu.core_type = #tpu.core_type<tc>, window_params = [{transform_indices = @transform_0, window_bounds = array<i64: 1, 2, 64, 64>}, {transform_indices = @transform_1, window_bounds = array<i64: 1, 2, 128, 64>}, {transform_indices = @transform_2, window_bounds = array<i64: 1, 2, 128, 64>}, {transform_indices = @transform_3, window_bounds = array<i64: 1, 1, 64, 128>}, {transform_indices = @transform_4, window_bounds = array<i64: 1, 2, 64, 128>}, {transform_indices = @transform_5, window_bounds = array<i64: 1, 64, 128>}]} {
    %c0 = arith.constant 0 : index
    %c0_0 = arith.constant 0 : index
    %c0_1 = arith.constant 0 : index
    %c0_2 = arith.constant 0 : index
    %0 = vector.load %arg5[%c0, %c0_0, %c0_1, %c0_2] : memref<1x1x64x128xf32, #tpu.memory_space<vmem>>, vector<1x1x64x128xf32>
    %1 = vector.shape_cast %0 : vector<1x1x64x128xf32> to vector<64x128xf32>
    %c0_3 = arith.constant 0 : index
    %c0_4 = arith.constant 0 : index
    %c0_5 = arith.constant 0 : index
    %c0_6 = arith.constant 0 : index
    %2 = vector.load %arg2[%c0_3, %c0_4, %c0_5, %c0_6] : memref<1x2x64x64xf32, #tpu.memory_space<vmem>>, vector<1x1x64x64xf32>
    %3 = vector.shape_cast %2 : vector<1x1x64x64xf32> to vector<64x64xf32>
    %cst = arith.constant 1.250000e-01 : f32
    %4 = vector.broadcast %cst : f32 to vector<64x64xf32>
    %5 = arith.mulf %3, %4 : vector<64x64xf32>
    %6 = arith.truncf %5 : vector<64x64xf32> to vector<64x64xbf16>
    %c0_7 = arith.constant 0 : index
    %c0_8 = arith.constant 0 : index
    %c0_9 = arith.constant 0 : index
    %c0_10 = arith.constant 0 : index
    %7 = vector.load %arg3[%c0_7, %c0_8, %c0_9, %c0_10] : memref<1x2x128x64xf32, #tpu.memory_space<vmem>>, vector<1x1x128x64xf32>
    %8 = vector.shape_cast %7 : vector<1x1x128x64xf32> to vector<128x64xf32>
    %9 = arith.truncf %8 : vector<128x64xf32> to vector<128x64xbf16>
    %cst_11 = arith.constant dense<0.000000e+00> : vector<64x128xf32>
    %10 = tpu.matmul %6, %9, %cst_11 {dimension_numbers = #tpu.dot_dimension_numbers<[1], [1], [0], [0], [0, 0, 1, 0], [], []>} : vector<64x64xbf16>, vector<128x64xbf16>, vector<64x128xf32> -> vector<64x128xf32>
    %11 = arith.addf %10, %1 : vector<64x128xf32>
    %cst_12 = arith.constant dense<0xFF800000> : vector<64xf32>
    %12 = vector.multi_reduction <maximumf>, %11, %cst_12 [1] : vector<64x128xf32> to vector<64xf32>
    %13 = vector.shape_cast %12 : vector<64xf32> to vector<64x1xf32>
    %14 = vector.broadcast %13 : vector<64x1xf32> to vector<64x128xf32>
    %15 = arith.subf %11, %14 : vector<64x128xf32>
    %16 = math.exp %15 : vector<64x128xf32>
    %cst_13 = arith.constant dense<0.000000e+00> : vector<64xf32>
    %17 = vector.multi_reduction <add>, %16, %cst_13 [1] : vector<64x128xf32> to vector<64xf32>
    %18 = vector.shape_cast %17 : vector<64xf32> to vector<64x1xf32>
    %cst_14 = arith.constant 1.000000e+02 : f32
    %19 = vector.broadcast %cst_14 : f32 to vector<64x1xf32>
    %20 = arith.divf %19, %18 : vector<64x1xf32>
    %c0_15 = arith.constant 0 : index
    %c0_16 = arith.constant 0 : index
    %c0_17 = arith.constant 0 : index
    %c0_18 = arith.constant 0 : index
    %21 = vector.load %arg6[%c0_15, %c0_16, %c0_17, %c0_18] : memref<1x2x64x128xf32, #tpu.memory_space<vmem>>, vector<1x1x64x128xf32>
    %22 = vector.shape_cast %21 : vector<1x1x64x128xf32> to vector<64x128xf32>
    %cst_19 = arith.constant 9.900000e-01 : f32
    %23 = vector.broadcast %cst_19 : f32 to vector<64x128xf32>
    %24 = arith.cmpf oge, %22, %23 : vector<64x128xf32>
    %25 = vector.broadcast %20 : vector<64x1xf32> to vector<64x128xf32>
    %26 = arith.mulf %16, %25 : vector<64x128xf32>
    %cst_20 = arith.constant 0.000000e+00 : f32
    %27 = vector.broadcast %cst_20 : f32 to vector<64x128xf32>
    %28 = arith.select %24, %26, %27 : vector<64x128xi1>, vector<64x128xf32>
    %29 = arith.truncf %28 : vector<64x128xf32> to vector<64x128xbf16>
    %c0_21 = arith.constant 0 : index
    %c0_22 = arith.constant 0 : index
    %c0_23 = arith.constant 0 : index
    %c0_24 = arith.constant 0 : index
    %30 = vector.load %arg4[%c0_21, %c0_22, %c0_23, %c0_24] : memref<1x2x128x64xf32, #tpu.memory_space<vmem>>, vector<1x1x128x64xf32>
    %31 = vector.shape_cast %30 : vector<1x1x128x64xf32> to vector<128x64xf32>
    %32 = arith.truncf %31 : vector<128x64xf32> to vector<128x64xbf16>
    %cst_25 = arith.constant dense<0.000000e+00> : vector<64x64xf32>
    %33 = tpu.matmul %29, %32, %cst_25 {dimension_numbers = #tpu.dot_dimension_numbers<[1], [0], [0], [1], [0, 0, 1, 1], [], []>} : vector<64x128xbf16>, vector<128x64xbf16>, vector<64x64xf32> -> vector<64x64xf32>
    %c0_26 = arith.constant 0 : index
    %c1 = arith.constant 1 : index
    %c0_27 = arith.constant 0 : index
    %c0_28 = arith.constant 0 : index
    %34 = vector.load %arg2[%c0_26, %c1, %c0_27, %c0_28] : memref<1x2x64x64xf32, #tpu.memory_space<vmem>>, vector<1x1x64x64xf32>
    %35 = vector.shape_cast %34 : vector<1x1x64x64xf32> to vector<64x64xf32>
    %cst_29 = arith.constant 1.250000e-01 : f32
    %36 = vector.broadcast %cst_29 : f32 to vector<64x64xf32>
    %37 = arith.mulf %35, %36 : vector<64x64xf32>
    %38 = arith.truncf %37 : vector<64x64xf32> to vector<64x64xbf16>
    %c0_30 = arith.constant 0 : index
    %c1_31 = arith.constant 1 : index
    %c0_32 = arith.constant 0 : index
    %c0_33 = arith.constant 0 : index
    %39 = vector.load %arg3[%c0_30, %c1_31, %c0_32, %c0_33] : memref<1x2x128x64xf32, #tpu.memory_space<vmem>>, vector<1x1x128x64xf32>
    %40 = vector.shape_cast %39 : vector<1x1x128x64xf32> to vector<128x64xf32>
    %41 = arith.truncf %40 : vector<128x64xf32> to vector<128x64xbf16>
    %cst_34 = arith.constant dense<0.000000e+00> : vector<64x128xf32>
    %42 = tpu.matmul %38, %41, %cst_34 {dimension_numbers = #tpu.dot_dimension_numbers<[1], [1], [0], [0], [0, 0, 1, 0], [], []>} : vector<64x64xbf16>, vector<128x64xbf16>, vector<64x128xf32> -> vector<64x128xf32>
    %43 = arith.addf %42, %1 : vector<64x128xf32>
    %cst_35 = arith.constant dense<0xFF800000> : vector<64xf32>
    %44 = vector.multi_reduction <maximumf>, %43, %cst_35 [1] : vector<64x128xf32> to vector<64xf32>
    %45 = vector.shape_cast %44 : vector<64xf32> to vector<64x1xf32>
    %46 = vector.broadcast %45 : vector<64x1xf32> to vector<64x128xf32>
    %47 = arith.subf %43, %46 : vector<64x128xf32>
    %48 = math.exp %47 : vector<64x128xf32>
    %cst_36 = arith.constant dense<0.000000e+00> : vector<64xf32>
    %49 = vector.multi_reduction <add>, %48, %cst_36 [1] : vector<64x128xf32> to vector<64xf32>
    %50 = vector.shape_cast %49 : vector<64xf32> to vector<64x1xf32>
    %cst_37 = arith.constant 1.000000e+02 : f32
    %51 = vector.broadcast %cst_37 : f32 to vector<64x1xf32>
    %52 = arith.divf %51, %50 : vector<64x1xf32>
    %c0_38 = arith.constant 0 : index
    %c1_39 = arith.constant 1 : index
    %c0_40 = arith.constant 0 : index
    %c0_41 = arith.constant 0 : index
    %53 = vector.load %arg6[%c0_38, %c1_39, %c0_40, %c0_41] : memref<1x2x64x128xf32, #tpu.memory_space<vmem>>, vector<1x1x64x128xf32>
    %54 = vector.shape_cast %53 : vector<1x1x64x128xf32> to vector<64x128xf32>
    %cst_42 = arith.constant 9.900000e-01 : f32
    %55 = vector.broadcast %cst_42 : f32 to vector<64x128xf32>
    %56 = arith.cmpf oge, %54, %55 : vector<64x128xf32>
    %57 = vector.broadcast %52 : vector<64x1xf32> to vector<64x128xf32>
    %58 = arith.mulf %48, %57 : vector<64x128xf32>
    %cst_43 = arith.constant 0.000000e+00 : f32
    %59 = vector.broadcast %cst_43 : f32 to vector<64x128xf32>
    %60 = arith.select %56, %58, %59 : vector<64x128xi1>, vector<64x128xf32>
    %61 = arith.truncf %60 : vector<64x128xf32> to vector<64x128xbf16>
    %c0_44 = arith.constant 0 : index
    %c1_45 = arith.constant 1 : index
    %c0_46 = arith.constant 0 : index
    %c0_47 = arith.constant 0 : index
    %62 = vector.load %arg4[%c0_44, %c1_45, %c0_46, %c0_47] : memref<1x2x128x64xf32, #tpu.memory_space<vmem>>, vector<1x1x128x64xf32>
    %63 = vector.shape_cast %62 : vector<1x1x128x64xf32> to vector<128x64xf32>
    %64 = arith.truncf %63 : vector<128x64xf32> to vector<128x64xbf16>
    %cst_48 = arith.constant dense<0.000000e+00> : vector<64x64xf32>
    %65 = tpu.matmul %61, %64, %cst_48 {dimension_numbers = #tpu.dot_dimension_numbers<[1], [0], [0], [1], [0, 0, 1, 1], [], []>} : vector<64x128xbf16>, vector<128x64xbf16>, vector<64x64xf32> -> vector<64x64xf32>
    %66 = tpu.concatenate %33, %65 in 1 : vector<64x64xf32>, vector<64x64xf32> -> vector<64x128xf32>
    %c0_49 = arith.constant 0 : index
    %c0_50 = arith.constant 0 : index
    %c0_51 = arith.constant 0 : index
    %67 = vector.load %arg7[%c0_49, %c0_50, %c0_51] : memref<1x64x128xf32, #tpu.memory_space<vmem>>, vector<1x64x128xf32>
    %68 = vector.shape_cast %67 : vector<1x64x128xf32> to vector<64x128xf32>
    %69 = vector.shape_cast %66 : vector<64x128xf32> to vector<1x64x128xf32>
    tpu.vector_store %arg7[%c0_49, %c0_50, %c0_51], %69 {strides = array<i32>} : memref<1x64x128xf32, #tpu.memory_space<vmem>>, vector<1x64x128xf32>,
    return
  }
  func.func @transform_0(%arg0: i32, %arg1: i32) -> (i32, i32, i32, i32) {
    %c0_i32 = arith.constant 0 : i32
    %c0_i32_0 = arith.constant 0 : i32
    %c0_i32_1 = arith.constant 0 : i32
    return %arg0, %c0_i32, %arg1, %c0_i32_0 : i32, i32, i32, i32
  }
  func.func @transform_1(%arg0: i32, %arg1: i32) -> (i32, i32, i32, i32) {
    %c0_i32 = arith.constant 0 : i32
    %c0_i32_0 = arith.constant 0 : i32
    %c0_i32_1 = arith.constant 0 : i32
    %c0_i32_2 = arith.constant 0 : i32
    return %arg0, %c0_i32, %c0_i32_0, %c0_i32_1 : i32, i32, i32, i32
  }
  func.func @transform_2(%arg0: i32, %arg1: i32) -> (i32, i32, i32, i32) {
    %c0_i32 = arith.constant 0 : i32
    %c0_i32_0 = arith.constant 0 : i32
    %c0_i32_1 = arith.constant 0 : i32
    %c0_i32_2 = arith.constant 0 : i32
    return %arg0, %c0_i32, %c0_i32_0, %c0_i32_1 : i32, i32, i32, i32
  }
  func.func @transform_3(%arg0: i32, %arg1: i32) -> (i32, i32, i32, i32) {
    %c0_i32 = arith.constant 0 : i32
    %c0_i32_0 = arith.constant 0 : i32
    %c0_i32_1 = arith.constant 0 : i32
    %c0_i32_2 = arith.constant 0 : i32
    return %c0_i32, %c0_i32_0, %arg1, %c0_i32_1 : i32, i32, i32, i32
  }
  func.func @transform_4(%arg0: i32, %arg1: i32) -> (i32, i32, i32, i32) {
    %c0_i32 = arith.constant 0 : i32
    %c0_i32_0 = arith.constant 0 : i32
    %c0_i32_1 = arith.constant 0 : i32
    return %arg0, %c0_i32, %arg1, %c0_i32_0 : i32, i32, i32, i32
  }
  func.func @transform_5(%arg0: i32, %arg1: i32) -> (i32, i32, i32) {
    %c0_i32 = arith.constant 0 : i32
    %c0_i32_0 = arith.constant 0 : i32
    return %arg0, %arg1, %c0_i32 : i32, i32, i32
  }
}

</mosaic_0001>

<llo_original>
// kernel: tpu_custom_call.1
$region0: #{tpu_custom_call.1}
  #allocation0 [shape = 'u32[]', space=smem, size = 0x4, offset = 0x4, fixed_abs, tag = 'smem constant byte address 0x4 - core index']
  #allocation1 [shape = 'u32[144,128]{1,0:T(1,128)}', space=vmem, size = 0x12000, scoped, tag = 'internal scratch']
  %s0 = inlined_call_operand.vmem [shape: f32[1,2,128,64], index: 0, kind: input, shape index: {}]
  %s1 = inlined_call_operand.vmem [shape: f32[1,2,128,64], index: 1, kind: input, shape index: {}]
  %s2 = inlined_call_operand.vmem [shape: f32[1,2,128,64], index: 2, kind: input, shape index: {}]
  %s3 = inlined_call_operand.vmem [shape: f32[1,1,128,128], index: 3, kind: input, shape index: {}]
  %s4 = inlined_call_operand.vmem [shape: f32[1,2,128,128], index: 4, kind: input, shape index: {}]
  %s5 = inlined_call_operand.hbm [shape: f32[1,128,128], index: 5, kind: output, shape index: {}]
  %s6 = sld [smem:[#allocation0]]
  $region129: #{tpu_custom_call.1} parent=0
    _
  %s8 = ssub.s32 1, %s6
  %s9 = scalar_select 0, %s8, %s6
  $region1: #{tpu_custom_call.1} parent=0
    #allocation2 [shape = 'u8[131072]{0}', space=vmem, size = 0x20000, scoped, tag = 'input window, operand 0']
    #allocation3 [shape = 'u8[131072]{0}', space=vmem, size = 0x20000, scoped, tag = 'input window, operand 4']
    #allocation4 [shape = 'u8[65536]{0}', space=vmem, size = 0x10000, scoped, tag = 'output window, operand 0']
    #allocation5 [shape = 's32[2]{0}', space=sflag, size = 0x8, scoped, tag = 'scoped memory for tpu_custom_call.1']
    %10 = vsyncpa [#allocation5], 0
    %s11 = scalar_lea.sflag [#allocation5], 1
    %12 = vsyncpa %s11, 0
    loop: start=0, step=1, limit=4
    $region2: #{tpu_custom_call.1} parent=1 // loop_pre_header
      _
    $region3: #{tpu_custom_call.1} parent=1 // loop_header
      %s14 = sphi 0, %s18
      %p15 = scmp.ge.s32.totalorder %s14, 4
      %s21 = sphi 0, %s33
      %s22 = sphi 0, %s29
      %s23 = sphi 0, %s21
      %s24 = sphi 0, %s22
      %s25 = sphi 0, %s23
      %s26 = sphi 0, %s24
      %s38 = sphi 0, %s40
      %s41 = sphi 0, %s38
      %s42 = sphi 0, %s41
      %s58 = sphi 0, %s42
      %s64 = sphi 0, %s66
      %s67 = sphi 0, %s64
      %s68 = sphi 0, %s67
      %s84 = sphi 0, %s68
      %s90 = sphi 0, %s92
      %s93 = sphi 0, %s90
      %s94 = sphi 0, %s93
      %s110 = sphi 0, %s94
      %s116 = sphi 0, %s118
      %s119 = sphi 0, %s116
      %s120 = sphi 0, %s119
      %s136 = sphi 0, %s120
      %s144 = sphi 0, %s146
      %s147 = sphi 0, %s144
      %s148 = sphi 0, %s147
      %s164 = sphi 0, %s148
      %s172 = sphi 0, %s174
      %s175 = sphi 0, %s172
      %s176 = sphi 0, %s175
      %s192 = sphi 0, %s176
    $region4: #{tpu_custom_call.1} parent=1 // loop_header_branch
      %17 = sbr.rel (%p15) target = $region8
    $region5: #{tpu_custom_call.1} parent=1 // loop_body
      %s19 = ssub.s32 %s14, 1
      %s20 = ssub.s32 %s14, 2
      %s27 = sadd.s32 1, %s22
      %p28 = scmp.ge.s32.totalorder %s27, 2
      %s29 = scalar_select %p28, 0, %s27
      %s30 = sadd.s32 1, %s21
      %s31 = scalar_select %p28, %s30, %s21
      %p32 = scmp.ge.s32.totalorder %s31, 1
      %s33 = scalar_select %p32, 0, %s31
      %s34 = ssub.s32 %s21, %s33
      %s35 = ssub.s32 %s22, %s29
      %s36 = sor.u32 %s34, %s35
      %p37 = scmp.eq.s32.totalorder %s36, 0
      %s39 = sadd.s32 %s38, 1
      %s40 = scalar_select %p37, %s38, %s39
      %p43 = pneg %p37
      %p44 = scmp.eq.s32.totalorder %s14, 1
      %p45 = por %p43, %p44
      %p46 = scmp.ne.s32.totalorder %s38, %s41
      %p47 = scmp.eq.s32.totalorder %s14, 0
      %p48 = por %p46, %p47
      %p49 = scmp.ne.s32.totalorder %s38, %s41
      %p50 = scmp.eq.s32.totalorder %s19, 1
      %p51 = por %p49, %p50
      %p52 = scmp.ne.s32.totalorder %s41, %s42
      %p53 = scmp.eq.s32.totalorder %s19, 0
      %p54 = por %p52, %p53
      %p55 = scmp.ne.s32.totalorder %s41, %s42
      %p56 = scmp.eq.s32.totalorder %s20, 1
      %p57 = por %p55, %p56
      %p59 = scmp.ne.s32.totalorder %s42, %s58
      %p60 = scmp.eq.s32.totalorder %s20, 0
      %p61 = por %p59, %p60
      %s62 = ssub.s32 %s21, %s33
      %p63 = scmp.eq.s32.totalorder %s62, 0
      %s65 = sadd.s32 %s64, 1
      %s66 = scalar_select %p63, %s64, %s65
      %p69 = pneg %p63
      %p70 = scmp.eq.s32.totalorder %s14, 1
      %p71 = por %p69, %p70
      %p72 = scmp.ne.s32.totalorder %s64, %s67
      %p73 = scmp.eq.s32.totalorder %s14, 0
      %p74 = por %p72, %p73
      %p75 = scmp.ne.s32.totalorder %s64, %s67
      %p76 = scmp.eq.s32.totalorder %s19, 1
      %p77 = por %p75, %p76
      %p78 = scmp.ne.s32.totalorder %s67, %s68
      %p79 = scmp.eq.s32.totalorder %s19, 0
      %p80 = por %p78, %p79
      %p81 = scmp.ne.s32.totalorder %s67, %s68
      %p82 = scmp.eq.s32.totalorder %s20, 1
      %p83 = por %p81, %p82
      %p85 = scmp.ne.s32.totalorder %s68, %s84
      %p86 = scmp.eq.s32.totalorder %s20, 0
      %p87 = por %p85, %p86
      %s88 = ssub.s32 %s21, %s33
      %p89 = scmp.eq.s32.totalorder %s88, 0
      %s91 = sadd.s32 %s90, 1
      %s92 = scalar_select %p89, %s90, %s91
      %p95 = pneg %p89
      %p96 = scmp.eq.s32.totalorder %s14, 1
      %p97 = por %p95, %p96
      %p98 = scmp.ne.s32.totalorder %s90, %s93
      %p99 = scmp.eq.s32.totalorder %s14, 0
      %p100 = por %p98, %p99
      %p101 = scmp.ne.s32.totalorder %s90, %s93
      %p102 = scmp.eq.s32.totalorder %s19, 1
      %p103 = por %p101, %p102
      %p104 = scmp.ne.s32.totalorder %s93, %s94
      %p105 = scmp.eq.s32.totalorder %s19, 0
      %p106 = por %p104, %p105
      %p107 = scmp.ne.s32.totalorder %s93, %s94
      %p108 = scmp.eq.s32.totalorder %s20, 1
      %p109 = por %p107, %p108
      %p111 = scmp.ne.s32.totalorder %s94, %s110
      %p112 = scmp.eq.s32.totalorder %s20, 0
      %p113 = por %p111, %p112
      %s114 = ssub.s32 %s22, %s29
      %p115 = scmp.eq.s32.totalorder %s114, 0
      %s117 = sadd.s32 %s116, 1
      %s118 = scalar_select %p115, %s116, %s117
      %p121 = pneg %p115
      %p122 = scmp.eq.s32.totalorder %s14, 1
      %p123 = por %p121, %p122
      %p124 = scmp.ne.s32.totalorder %s116, %s119
      %p125 = scmp.eq.s32.totalorder %s14, 0
      %p126 = por %p124, %p125
      %p127 = scmp.ne.s32.totalorder %s116, %s119
      %p128 = scmp.eq.s32.totalorder %s19, 1
      %p129 = por %p127, %p128
      %p130 = scmp.ne.s32.totalorder %s119, %s120
      %p131 = scmp.eq.s32.totalorder %s19, 0
      %p132 = por %p130, %p131
      %p133 = scmp.ne.s32.totalorder %s119, %s120
      %p134 = scmp.eq.s32.totalorder %s20, 1
      %p135 = por %p133, %p134
      %p137 = scmp.ne.s32.totalorder %s120, %s136
      %p138 = scmp.eq.s32.totalorder %s20, 0
      %p139 = por %p137, %p138
      %s140 = ssub.s32 %s21, %s33
      %s141 = ssub.s32 %s22, %s29
      %s142 = sor.u32 %s140, %s141
      %p143 = scmp.eq.s32.totalorder %s142, 0
      %s145 = sadd.s32 %s144, 1
      %s146 = scalar_select %p143, %s144, %s145
      %p149 = pneg %p143
      %p150 = scmp.eq.s32.totalorder %s14, 1
      %p151 = por %p149, %p150
      %p152 = scmp.ne.s32.totalorder %s144, %s147
      %p153 = scmp.eq.s32.totalorder %s14, 0
      %p154 = por %p152, %p153
      %p155 = scmp.ne.s32.totalorder %s144, %s147
      %p156 = scmp.eq.s32.totalorder %s19, 1
      %p157 = por %p155, %p156
      %p158 = scmp.ne.s32.totalorder %s147, %s148
      %p159 = scmp.eq.s32.totalorder %s19, 0
      %p160 = por %p158, %p159
      %p161 = scmp.ne.s32.totalorder %s147, %s148
      %p162 = scmp.eq.s32.totalorder %s20, 1
      %p163 = por %p161, %p162
      %p165 = scmp.ne.s32.totalorder %s148, %s164
      %p166 = scmp.eq.s32.totalorder %s20, 0
      %p167 = por %p165, %p166
      %s168 = ssub.s32 %s21, %s33
      %s169 = ssub.s32 %s22, %s29
      %s170 = sor.u32 %s168, %s169
      %p171 = scmp.eq.s32.totalorder %s170, 0
      %s173 = sadd.s32 %s172, 1
      %s174 = scalar_select %p171, %s172, %s173
      %p177 = pneg %p171
      %p178 = scmp.eq.s32.totalorder %s14, 1
      %p179 = por %p177, %p178
      %p180 = scmp.ne.s32.totalorder %s172, %s175
      %p181 = scmp.eq.s32.totalorder %s14, 0
      %p182 = por %p180, %p181
      %p183 = scmp.ne.s32.totalorder %s172, %s175
      %p184 = scmp.eq.s32.totalorder %s19, 1
      %p185 = por %p183, %p184
      %p186 = scmp.ne.s32.totalorder %s175, %s176
      %p187 = scmp.eq.s32.totalorder %s19, 0
      %p188 = por %p186, %p187
      %p189 = scmp.ne.s32.totalorder %s175, %s176
      %p190 = scmp.eq.s32.totalorder %s20, 1
      %p191 = por %p189, %p190
      %p193 = scmp.ne.s32.totalorder %s176, %s192
      %p194 = scmp.eq.s32.totalorder %s20, 0
      %p195 = por %p193, %p194
      %p196 = scmp.le.s32.totalorder 1, %s14
      %p197 = scmp.lt.s32.totalorder %s14, 3
      %p198 = pnand %p196, %p197
      %p199 = pneg %p198
      // Predicated region
      $region9: #{tpu_custom_call.1} parent=5 // pred_check
        _
      $region10: #{tpu_custom_call.1} parent=5 // pred_check_branch
        %201 = sbr.rel (%p198) target = $region12
      $region11: #{tpu_custom_call.1} parent=5 // pred_region
        %s202 = ssub.s32 %s14, 1
        // Predicated region
        $region13: #{tpu_custom_call.1} parent=11 // pred_check
          %p203 = pneg %p80
        $region14: #{tpu_custom_call.1} parent=11 // pred_check_branch
          %205 = sbr.rel (%p203) target = $region16
        $region15: #{tpu_custom_call.1} parent=11 // pred_region
          %p206 = scmp.lt.s32.totalorder %s23, 0
          %s207 = scalar_select %p206, %s23, 0
          %s208 = smul.addr %s207, 32
          %s209 = smul.addr %s208, 8
          %s210 = scalar_lea.vmem %s1, %s209
        $region16: #{tpu_custom_call.1} parent=11 // pred_fallthru
          _
        // Predicated region
        $region17: #{tpu_custom_call.1} parent=11 // pred_check
          %p211 = pneg %p106
        $region18: #{tpu_custom_call.1} parent=11 // pred_check_branch
          %213 = sbr.rel (%p211) target = $region20
        $region19: #{tpu_custom_call.1} parent=11 // pred_region
          %p214 = scmp.lt.s32.totalorder %s23, 0
          %s215 = scalar_select %p214, %s23, 0
          %s216 = smul.addr %s215, 32
          %s217 = smul.addr %s216, 8
          %s218 = scalar_lea.vmem %s2, %s217
        $region20: #{tpu_custom_call.1} parent=11 // pred_fallthru
          _
      $region12: #{tpu_custom_call.1} parent=5 // pred_fallthru
        _
      %p219 = scmp.lt.s32.totalorder %s14, 2
      // Predicated region
      $region21: #{tpu_custom_call.1} parent=5 // pred_check
        %p220 = pneg %p219
      $region22: #{tpu_custom_call.1} parent=5 // pred_check_branch
        %222 = sbr.rel (%p220) target = $region24
      $region23: #{tpu_custom_call.1} parent=5 // pred_region
        // Predicated region
        $region25: #{tpu_custom_call.1} parent=23 // pred_check
          %p223 = pneg %p48
        $region26: #{tpu_custom_call.1} parent=23 // pred_check_branch
          %225 = sbr.rel (%p223) target = $region28
        $region27: #{tpu_custom_call.1} parent=23 // pred_region
          %s226 = sand.u32 %s38, 1
          %s227 = sand.u32 %s38, 1
          %s228 = smul.addr %s227, 128
          %s229 = scalar_lea.vmem [#allocation2], %s228
          %s230 = smul.u32 8, %s22
          %s231 = smul.addr %s21, 32
          %s232 = sadd.s32 %s230, %s231
          %s233 = smul.addr %s232, 8
          %s234 = scalar_lea.vmem %s0, %s233
          // Predicated region
          $region29: #{tpu_custom_call.1} parent=27 // pred_check
            _
          $region30: #{tpu_custom_call.1} parent=27 // pred_check_branch
            %236 = sbr.rel (0) target = $region32
          $region31: #{tpu_custom_call.1} parent=27 // pred_region
            // Predicated region
            $region33: #{tpu_custom_call.1} parent=31 // pred_check
              _
            $region34: #{tpu_custom_call.1} parent=31 // pred_check_branch
              %238 = sbr.rel (0) target = $region36
            $region35: #{tpu_custom_call.1} parent=31 // pred_region
              // Predicated region
              $region48: #{tpu_custom_call.1} parent=35 // pred_check
                _
              $region49: #{tpu_custom_call.1} parent=35 // pred_check_branch
                %283 = sbr.rel (0) target = $region51
              $region50: #{tpu_custom_call.1} parent=35 // pred_region
                loop: start=0, step=1, limit=1
                $region52: #{tpu_custom_call.1} parent=50 // loop_pre_header
                  _
                $region53: #{tpu_custom_call.1} parent=50 // loop_header
                  %s285 = sphi 0, %s289
                  %p286 = scmp.ge.s32.totalorder %s285, 1
                  %s290 = sphi %s234, %s234
                  %s291 = sphi %s229, %s229
                $region54: #{tpu_custom_call.1} parent=50 // loop_header_branch
                  %288 = sbr.rel (%p286) target = $region58
                $region55: #{tpu_custom_call.1} parent=50 // loop_body
                  %v292 = vld [vmem:[%s290] sm:$0xff]
                  %293 = vst [vmem:[%s291] sm:$0xff] %v292
                  %v294 = vld [vmem:[%s290 + $0x8] sm:$0xff]
                  %295 = vst [vmem:[%s291 + $0x8] sm:$0xff] %v294
                  %v296 = vld [vmem:[%s290 + $0x10] sm:$0xff]
                  %297 = vst [vmem:[%s291 + $0x10] sm:$0xff] %v296
                  %v298 = vld [vmem:[%s290 + $0x18] sm:$0xff]
                  %299 = vst [vmem:[%s291 + $0x18] sm:$0xff] %v298
                  %v300 = vld [vmem:[%s290 + $0x20] sm:$0xff]
                  %301 = vst [vmem:[%s291 + $0x20] sm:$0xff] %v300
                  %v302 = vld [vmem:[%s290 + $0x28] sm:$0xff]
                  %303 = vst [vmem:[%s291 + $0x28] sm:$0xff] %v302
                  %v304 = vld [vmem:[%s290 + $0x30] sm:$0xff]
                  %305 = vst [vmem:[%s291 + $0x30] sm:$0xff] %v304
                  %v306 = vld [vmem:[%s290 + $0x38] sm:$0xff]
                  %307 = vst [vmem:[%s291 + $0x38] sm:$0xff] %v306
                  %v308 = vld [vmem:[%s290 + $0x80] sm:$0xff]
                  %309 = vst [vmem:[%s291 + $0x40] sm:$0xff] %v308
                  %v310 = vld [vmem:[%s290 + $0x88] sm:$0xff]
                  %311 = vst [vmem:[%s291 + $0x48] sm:$0xff] %v310
                  %v312 = vld [vmem:[%s290 + $0x90] sm:$0xff]
                  %313 = vst [vmem:[%s291 + $0x50] sm:$0xff] %v312
                  %v314 = vld [vmem:[%s290 + $0x98] sm:$0xff]
                  %315 = vst [vmem:[%s291 + $0x58] sm:$0xff] %v314
                  %v316 = vld [vmem:[%s290 + $0xa0] sm:$0xff]
                  %317 = vst [vmem:[%s291 + $0x60] sm:$0xff] %v316
                  %v318 = vld [vmem:[%s290 + $0xa8] sm:$0xff]
                  %319 = vst [vmem:[%s291 + $0x68] sm:$0xff] %v318
                  %v320 = vld [vmem:[%s290 + $0xb0] sm:$0xff]
                  %321 = vst [vmem:[%s291 + $0x70] sm:$0xff] %v320
                  %v322 = vld [vmem:[%s290 + $0xb8] sm:$0xff]
                  %323 = vst [vmem:[%s291 + $0x78] sm:$0xff] %v322
                $region56: #{tpu_custom_call.1} parent=50 // loop_footer
                  %s289 = sadd.s32 1, %s285
                $region57: #{tpu_custom_call.1} parent=50 // loop_footer_branch
                  %284 = sbr.rel target = $region53
                $region58: #{tpu_custom_call.1} parent=50 // loop_exit
                  _
              $region51: #{tpu_custom_call.1} parent=35 // pred_fallthru
                _
              // Predicated region
              $region59: #{tpu_custom_call.1} parent=35 // pred_check
                _
              $region60: #{tpu_custom_call.1} parent=35 // pred_check_branch
                %325 = sbr.rel target = $region62
              $region61: #{tpu_custom_call.1} parent=35 // pred_region
                _
              $region62: #{tpu_custom_call.1} parent=35 // pred_fallthru
                _
            $region36: #{tpu_custom_call.1} parent=31 // pred_fallthru
              _
            // Predicated region
            $region37: #{tpu_custom_call.1} parent=31 // pred_check
              _
            $region38: #{tpu_custom_call.1} parent=31 // pred_check_branch
              %240 = sbr.rel target = $region40
            $region39: #{tpu_custom_call.1} parent=31 // pred_region
              loop: start=0, step=1, limit=1
              $region41: #{tpu_custom_call.1} parent=39 // loop_pre_header
                _
              $region42: #{tpu_custom_call.1} parent=39 // loop_header
                %s243 = sphi 0, %s247
                %p244 = scmp.ge.s32.totalorder %s243, 1
                %s248 = sphi %s234, %s234
                %s249 = sphi %s229, %s229
              $region43: #{tpu_custom_call.1} parent=39 // loop_header_branch
                %246 = sbr.rel (%p244) target = $region47
              $region44: #{tpu_custom_call.1} parent=39 // loop_body
                %v250 = vld [vmem:[%s248] sm:$0xff]
                %251 = vst [vmem:[%s249] sm:$0xff] %v250
                %v252 = vld [vmem:[%s248 + $0x8] sm:$0xff]
                %253 = vst [vmem:[%s249 + $0x8] sm:$0xff] %v252
                %v254 = vld [vmem:[%s248 + $0x10] sm:$0xff]
                %255 = vst [vmem:[%s249 + $0x10] sm:$0xff] %v254
                %v256 = vld [vmem:[%s248 + $0x18] sm:$0xff]
                %257 = vst [vmem:[%s249 + $0x18] sm:$0xff] %v256
                %v258 = vld [vmem:[%s248 + $0x20] sm:$0xff]
                %259 = vst [vmem:[%s249 + $0x20] sm:$0xff] %v258
                %v260 = vld [vmem:[%s248 + $0x28] sm:$0xff]
                %261 = vst [vmem:[%s249 + $0x28] sm:$0xff] %v260
                %v262 = vld [vmem:[%s248 + $0x30] sm:$0xff]
                %263 = vst [vmem:[%s249 + $0x30] sm:$0xff] %v262
                %v264 = vld [vmem:[%s248 + $0x38] sm:$0xff]
                %265 = vst [vmem:[%s249 + $0x38] sm:$0xff] %v264
                %v266 = vld [vmem:[%s248 + $0x80] sm:$0xff]
                %267 = vst [vmem:[%s249 + $0x40] sm:$0xff] %v266
                %v268 = vld [vmem:[%s248 + $0x88] sm:$0xff]
                %269 = vst [vmem:[%s249 + $0x48] sm:$0xff] %v268
                %v270 = vld [vmem:[%s248 + $0x90] sm:$0xff]
                %271 = vst [vmem:[%s249 + $0x50] sm:$0xff] %v270
                %v272 = vld [vmem:[%s248 + $0x98] sm:$0xff]
                %273 = vst [vmem:[%s249 + $0x58] sm:$0xff] %v272
                %v274 = vld [vmem:[%s248 + $0xa0] sm:$0xff]
                %275 = vst [vmem:[%s249 + $0x60] sm:$0xff] %v274
                %v276 = vld [vmem:[%s248 + $0xa8] sm:$0xff]
                %277 = vst [vmem:[%s249 + $0x68] sm:$0xff] %v276
                %v278 = vld [vmem:[%s248 + $0xb0] sm:$0xff]
                %279 = vst [vmem:[%s249 + $0x70] sm:$0xff] %v278
                %v280 = vld [vmem:[%s248 + $0xb8] sm:$0xff]
                %281 = vst [vmem:[%s249 + $0x78] sm:$0xff] %v280
              $region45: #{tpu_custom_call.1} parent=39 // loop_footer
                %s247 = sadd.s32 1, %s243
              $region46: #{tpu_custom_call.1} parent=39 // loop_footer_branch
                %242 = sbr.rel target = $region42
              $region47: #{tpu_custom_call.1} parent=39 // loop_exit
                _
            $region40: #{tpu_custom_call.1} parent=31 // pred_fallthru
              _
          $region32: #{tpu_custom_call.1} parent=27 // pred_fallthru
            _
          %326 = vnop
        $region28: #{tpu_custom_call.1} parent=23 // pred_fallthru
          _
        // Predicated region
        $region63: #{tpu_custom_call.1} parent=23 // pred_check
          %p327 = pneg %p126
        $region64: #{tpu_custom_call.1} parent=23 // pred_check_branch
          %329 = sbr.rel (%p327) target = $region66
        $region65: #{tpu_custom_call.1} parent=23 // pred_region
          %s330 = smul.u32 8, %s22
          %p331 = scmp.lt.s32.totalorder %s330, 15
          %s332 = scalar_select %p331, %s330, 15
          %s333 = smul.addr %s332, 8
          %s334 = scalar_lea.vmem %s3, %s333
          %s335 = smul.u32 8, %s22
        $region66: #{tpu_custom_call.1} parent=23 // pred_fallthru
          _
        // Predicated region
        $region67: #{tpu_custom_call.1} parent=23 // pred_check
          %p336 = pneg %p154
        $region68: #{tpu_custom_call.1} parent=23 // pred_check_branch
          %338 = sbr.rel (%p336) target = $region70
        $region69: #{tpu_custom_call.1} parent=23 // pred_region
          %s339 = sand.u32 %s144, 1
          %s340 = sand.u32 %s144, 1
          %s341 = smul.addr %s340, 128
          %s342 = scalar_lea.vmem [#allocation3], %s341
          %s343 = smul.u32 8, %s22
          %s344 = smul.addr %s21, 32
          %s345 = sadd.s32 %s343, %s344
          %s346 = smul.addr %s345, 8
          %s347 = scalar_lea.vmem %s4, %s346
          // Predicated region
          $region71: #{tpu_custom_call.1} parent=69 // pred_check
            _
          $region72: #{tpu_custom_call.1} parent=69 // pred_check_branch
            %349 = sbr.rel (0) target = $region74
          $region73: #{tpu_custom_call.1} parent=69 // pred_region
            // Predicated region
            $region75: #{tpu_custom_call.1} parent=73 // pred_check
              _
            $region76: #{tpu_custom_call.1} parent=73 // pred_check_branch
              %351 = sbr.rel (0) target = $region78
            $region77: #{tpu_custom_call.1} parent=73 // pred_region
              // Predicated region
              $region90: #{tpu_custom_call.1} parent=77 // pred_check
                _
              $region91: #{tpu_custom_call.1} parent=77 // pred_check_branch
                %396 = sbr.rel (0) target = $region93
              $region92: #{tpu_custom_call.1} parent=77 // pred_region
                loop: start=0, step=1, limit=1
                $region94: #{tpu_custom_call.1} parent=92 // loop_pre_header
                  _
                $region95: #{tpu_custom_call.1} parent=92 // loop_header
                  %s398 = sphi 0, %s402
                  %p399 = scmp.ge.s32.totalorder %s398, 1
                  %s403 = sphi %s347, %s347
                  %s404 = sphi %s342, %s342
                $region96: #{tpu_custom_call.1} parent=92 // loop_header_branch
                  %401 = sbr.rel (%p399) target = $region100
                $region97: #{tpu_custom_call.1} parent=92 // loop_body
                  %v405 = vld [vmem:[%s403] sm:$0xff]
                  %406 = vst [vmem:[%s404] sm:$0xff] %v405
                  %v407 = vld [vmem:[%s403 + $0x8] sm:$0xff]
                  %408 = vst [vmem:[%s404 + $0x8] sm:$0xff] %v407
                  %v409 = vld [vmem:[%s403 + $0x10] sm:$0xff]
                  %410 = vst [vmem:[%s404 + $0x10] sm:$0xff] %v409
                  %v411 = vld [vmem:[%s403 + $0x18] sm:$0xff]
                  %412 = vst [vmem:[%s404 + $0x18] sm:$0xff] %v411
                  %v413 = vld [vmem:[%s403 + $0x20] sm:$0xff]
                  %414 = vst [vmem:[%s404 + $0x20] sm:$0xff] %v413
                  %v415 = vld [vmem:[%s403 + $0x28] sm:$0xff]
                  %416 = vst [vmem:[%s404 + $0x28] sm:$0xff] %v415
                  %v417 = vld [vmem:[%s403 + $0x30] sm:$0xff]
                  %418 = vst [vmem:[%s404 + $0x30] sm:$0xff] %v417
                  %v419 = vld [vmem:[%s403 + $0x38] sm:$0xff]
                  %420 = vst [vmem:[%s404 + $0x38] sm:$0xff] %v419
                  %v421 = vld [vmem:[%s403 + $0x80] sm:$0xff]
                  %422 = vst [vmem:[%s404 + $0x40] sm:$0xff] %v421
                  %v423 = vld [vmem:[%s403 + $0x88] sm:$0xff]
                  %424 = vst [vmem:[%s404 + $0x48] sm:$0xff] %v423
                  %v425 = vld [vmem:[%s403 + $0x90] sm:$0xff]
                  %426 = vst [vmem:[%s404 + $0x50] sm:$0xff] %v425
                  %v427 = vld [vmem:[%s403 + $0x98] sm:$0xff]
                  %428 = vst [vmem:[%s404 + $0x58] sm:$0xff] %v427
                  %v429 = vld [vmem:[%s403 + $0xa0] sm:$0xff]
                  %430 = vst [vmem:[%s404 + $0x60] sm:$0xff] %v429
                  %v431 = vld [vmem:[%s403 + $0xa8] sm:$0xff]
                  %432 = vst [vmem:[%s404 + $0x68] sm:$0xff] %v431
                  %v433 = vld [vmem:[%s403 + $0xb0] sm:$0xff]
                  %434 = vst [vmem:[%s404 + $0x70] sm:$0xff] %v433
                  %v435 = vld [vmem:[%s403 + $0xb8] sm:$0xff]
                  %436 = vst [vmem:[%s404 + $0x78] sm:$0xff] %v435
                $region98: #{tpu_custom_call.1} parent=92 // loop_footer
                  %s402 = sadd.s32 1, %s398
                $region99: #{tpu_custom_call.1} parent=92 // loop_footer_branch
                  %397 = sbr.rel target = $region95
                $region100: #{tpu_custom_call.1} parent=92 // loop_exit
                  _
              $region93: #{tpu_custom_call.1} parent=77 // pred_fallthru
                _
              // Predicated region
              $region101: #{tpu_custom_call.1} parent=77 // pred_check
                _
              $region102: #{tpu_custom_call.1} parent=77 // pred_check_branch
                %438 = sbr.rel target = $region104
              $region103: #{tpu_custom_call.1} parent=77 // pred_region
                _
              $region104: #{tpu_custom_call.1} parent=77 // pred_fallthru
                _
            $region78: #{tpu_custom_call.1} parent=73 // pred_fallthru
              _
            // Predicated region
            $region79: #{tpu_custom_call.1} parent=73 // pred_check
              _
            $region80: #{tpu_custom_call.1} parent=73 // pred_check_branch
              %353 = sbr.rel target = $region82
            $region81: #{tpu_custom_call.1} parent=73 // pred_region
              loop: start=0, step=1, limit=1
              $region83: #{tpu_custom_call.1} parent=81 // loop_pre_header
                _
              $region84: #{tpu_custom_call.1} parent=81 // loop_header
                %s356 = sphi 0, %s360
                %p357 = scmp.ge.s32.totalorder %s356, 1
                %s361 = sphi %s347, %s347
                %s362 = sphi %s342, %s342
              $region85: #{tpu_custom_call.1} parent=81 // loop_header_branch
                %359 = sbr.rel (%p357) target = $region89
              $region86: #{tpu_custom_call.1} parent=81 // loop_body
                %v363 = vld [vmem:[%s361] sm:$0xff]
                %364 = vst [vmem:[%s362] sm:$0xff] %v363
                %v365 = vld [vmem:[%s361 + $0x8] sm:$0xff]
                %366 = vst [vmem:[%s362 + $0x8] sm:$0xff] %v365
                %v367 = vld [vmem:[%s361 + $0x10] sm:$0xff]
                %368 = vst [vmem:[%s362 + $0x10] sm:$0xff] %v367
                %v369 = vld [vmem:[%s361 + $0x18] sm:$0xff]
                %370 = vst [vmem:[%s362 + $0x18] sm:$0xff] %v369
                %v371 = vld [vmem:[%s361 + $0x20] sm:$0xff]
                %372 = vst [vmem:[%s362 + $0x20] sm:$0xff] %v371
                %v373 = vld [vmem:[%s361 + $0x28] sm:$0xff]
                %374 = vst [vmem:[%s362 + $0x28] sm:$0xff] %v373
                %v375 = vld [vmem:[%s361 + $0x30] sm:$0xff]
                %376 = vst [vmem:[%s362 + $0x30] sm:$0xff] %v375
                %v377 = vld [vmem:[%s361 + $0x38] sm:$0xff]
                %378 = vst [vmem:[%s362 + $0x38] sm:$0xff] %v377
                %v379 = vld [vmem:[%s361 + $0x80] sm:$0xff]
                %380 = vst [vmem:[%s362 + $0x40] sm:$0xff] %v379
                %v381 = vld [vmem:[%s361 + $0x88] sm:$0xff]
                %382 = vst [vmem:[%s362 + $0x48] sm:$0xff] %v381
                %v383 = vld [vmem:[%s361 + $0x90] sm:$0xff]
                %384 = vst [vmem:[%s362 + $0x50] sm:$0xff] %v383
                %v385 = vld [vmem:[%s361 + $0x98] sm:$0xff]
                %386 = vst [vmem:[%s362 + $0x58] sm:$0xff] %v385
                %v387 = vld [vmem:[%s361 + $0xa0] sm:$0xff]
                %388 = vst [vmem:[%s362 + $0x60] sm:$0xff] %v387
                %v389 = vld [vmem:[%s361 + $0xa8] sm:$0xff]
                %390 = vst [vmem:[%s362 + $0x68] sm:$0xff] %v389
                %v391 = vld [vmem:[%s361 + $0xb0] sm:$0xff]
                %392 = vst [vmem:[%s362 + $0x70] sm:$0xff] %v391
                %v393 = vld [vmem:[%s361 + $0xb8] sm:$0xff]
                %394 = vst [vmem:[%s362 + $0x78] sm:$0xff] %v393
              $region87: #{tpu_custom_call.1} parent=81 // loop_footer
                %s360 = sadd.s32 1, %s356
              $region88: #{tpu_custom_call.1} parent=81 // loop_footer_branch
                %355 = sbr.rel target = $region84
              $region89: #{tpu_custom_call.1} parent=81 // loop_exit
                _
            $region82: #{tpu_custom_call.1} parent=73 // pred_fallthru
              _
          $region74: #{tpu_custom_call.1} parent=69 // pred_fallthru
            _
          %439 = vnop
        $region70: #{tpu_custom_call.1} parent=23 // pred_fallthru
          _
      $region24: #{tpu_custom_call.1} parent=5 // pred_fallthru
        _
      %p440 = scmp.le.s32.totalorder 1, %s14
      %p441 = scmp.lt.s32.totalorder %s14, 3
      %p442 = pnand %p440, %p441
      %p443 = pneg %p442
      // Predicated region
      $region105: #{tpu_custom_call.1} parent=5 // pred_check
        _
      $region106: #{tpu_custom_call.1} parent=5 // pred_check_branch
        %445 = sbr.rel (%p442) target = $region108
      $region107: #{tpu_custom_call.1} parent=5 // pred_region
        %s446 = ssub.s32 %s14, 1
        %s447 = sand.u32 %s41, 1
        %s448 = sand.u32 %s41, 1
        %s449 = smul.addr %s448, 128
        %s450 = scalar_lea.vmem [#allocation2], %s449
        // Predicated region
        $region109: #{tpu_custom_call.1} parent=107 // pred_check
          %p451 = pneg %p54
        $region110: #{tpu_custom_call.1} parent=107 // pred_check_branch
          %453 = sbr.rel (%p451) target = $region112
        $region111: #{tpu_custom_call.1} parent=107 // pred_region
          _
        $region112: #{tpu_custom_call.1} parent=107 // pred_fallthru
          _
        %s454 = sand.u32 %s147, 1
        %s455 = sand.u32 %s147, 1
        %s456 = smul.addr %s455, 128
        %s457 = scalar_lea.vmem [#allocation3], %s456
        // Predicated region
        $region113: #{tpu_custom_call.1} parent=107 // pred_check
          %p458 = pneg %p160
        $region114: #{tpu_custom_call.1} parent=107 // pred_check_branch
          %460 = sbr.rel (%p458) target = $region116
        $region115: #{tpu_custom_call.1} parent=107 // pred_region
          _
        $region116: #{tpu_custom_call.1} parent=107 // pred_fallthru
          _
        %s461 = sand.u32 %s41, 1
        %s462 = sand.u32 %s41, 1
        %s463 = smul.addr %s462, 128
        %s464 = scalar_lea.vmem [#allocation2], %s463
        %p465 = pneg %p54
        %p466 = pneg %p51
        %p467 = scmp.lt.s32.totalorder %s23, 0
        %s468 = scalar_select %p467, %s23, 0
        %s469 = smul.addr %s468, 32
        %s470 = smul.addr %s469, 8
        %s471 = scalar_lea.vmem %s1, %s470
        %p472 = pneg %p80
        %p473 = pneg %p77
        %p474 = scmp.lt.s32.totalorder %s23, 0
        %s475 = scalar_select %p474, %s23, 0
        %s476 = smul.addr %s475, 32
        %s477 = smul.addr %s476, 8
        %s478 = scalar_lea.vmem %s2, %s477
        %p479 = pneg %p106
        %p480 = pneg %p103
        %s481 = smul.u32 8, %s24
        %p482 = scmp.lt.s32.totalorder %s481, 15
        %s483 = scalar_select %p482, %s481, 15
        %s484 = smul.addr %s483, 8
        %s485 = scalar_lea.vmem %s3, %s484
        %p486 = pneg %p132
        %p487 = pneg %p129
        %s488 = sand.u32 %s147, 1
        %s489 = sand.u32 %s147, 1
        %s490 = smul.addr %s489, 128
        %s491 = scalar_lea.vmem [#allocation3], %s490
        %p492 = pneg %p160
        %p493 = pneg %p157
        %p494 = pneg %p188
        %p495 = pneg %p185
        %s496 = sand.u32 %s175, 1
        %s497 = scalar_lea.sflag [#allocation5], %s496
        %s498 = sand.u32 %s175, 1
        %s499 = smul.addr %s498, 64
        %s500 = scalar_lea.vmem [#allocation4], %s499
        %s501 = smul.u32 8, %s24
        %p502 = scmp.lt.s32.totalorder %s23, 0
        %s503 = scalar_select %p502, %s23, 0
        %s504 = smul.addr %s503, 32
        %s505 = smul.addr %s504, 8
        %s506 = scalar_lea.vmem %s1, %s505
        %p507 = scmp.lt.s32.totalorder %s23, 0
        %s508 = scalar_select %p507, %s23, 0
        %s509 = smul.addr %s508, 32
        %s510 = smul.addr %s509, 8
        %s511 = scalar_lea.vmem %s2, %s510
        %s512 = smul.u32 8, %s24
        %p513 = scmp.lt.s32.totalorder %s512, 15
        %s514 = scalar_select %p513, %s512, 15
        %s515 = smul.addr %s514, 8
        %s516 = scalar_lea.vmem %s3, %s515
        %s517 = smul.u32 8, %s24
        %s518 = smul.u32 8, %s24
        %s519 = smul.u32 8, %s24
        %v521 = vld [vmem:[%s516] sm:$0xff]
        %v522 = vld [vmem:[%s516 + $0x8] sm:$0xff]
        %v523 = vld [vmem:[%s516 + $0x10] sm:$0xff]
        %v524 = vld [vmem:[%s516 + $0x18] sm:$0xff]
        %v525 = vld [vmem:[%s516 + $0x20] sm:$0xff]
        %v526 = vld [vmem:[%s516 + $0x28] sm:$0xff]
        %v527 = vld [vmem:[%s516 + $0x30] sm:$0xff]
        %v528 = vld [vmem:[%s516 + $0x38] sm:$0xff]
        %v529 = vld [vmem:[%s450] sm:$0xff]
        %v530 = vld [vmem:[%s450 + $0x8] sm:$0xff]
        %v531 = vld [vmem:[%s450 + $0x10] sm:$0xff]
        %v532 = vld [vmem:[%s450 + $0x18] sm:$0xff]
        %v533 = vld [vmem:[%s450 + $0x20] sm:$0xff]
        %v534 = vld [vmem:[%s450 + $0x28] sm:$0xff]
        %v535 = vld [vmem:[%s450 + $0x30] sm:$0xff]
        %v536 = vld [vmem:[%s450 + $0x38] sm:$0xff]
        %v537 = vmul.f32 %v529, 0.125
        %v538 = vmul.f32 %v530, 0.125
        %v539 = vmul.f32 %v531, 0.125
        %v540 = vmul.f32 %v532, 0.125
        %v541 = vmul.f32 %v533, 0.125
        %v542 = vmul.f32 %v534, 0.125
        %v543 = vmul.f32 %v535, 0.125
        %v544 = vmul.f32 %v536, 0.125
        %v545 = vpack.c.bf16 %v538, %v537
        %v546 = vpack.c.bf16 %v540, %v539
        %v547 = vpack.c.bf16 %v542, %v541
        %v548 = vpack.c.bf16 %v544, %v543
        %v549 = vld [vmem:[%s506] sm:$0xff]
        %v550 = vld [vmem:[%s506 + $0x8] sm:$0xff]
        %v551 = vld [vmem:[%s506 + $0x10] sm:$0xff]
        %v552 = vld [vmem:[%s506 + $0x18] sm:$0xff]
        %v553 = vld [vmem:[%s506 + $0x20] sm:$0xff]
        %v554 = vld [vmem:[%s506 + $0x28] sm:$0xff]
        %v555 = vld [vmem:[%s506 + $0x30] sm:$0xff]
        %v556 = vld [vmem:[%s506 + $0x38] sm:$0xff]
        %v557 = vld [vmem:[%s506 + $0x40] sm:$0xff]
        %v558 = vld [vmem:[%s506 + $0x48] sm:$0xff]
        %v559 = vld [vmem:[%s506 + $0x50] sm:$0xff]
        %v560 = vld [vmem:[%s506 + $0x58] sm:$0xff]
        %v561 = vld [vmem:[%s506 + $0x60] sm:$0xff]
        %v562 = vld [vmem:[%s506 + $0x68] sm:$0xff]
        %v563 = vld [vmem:[%s506 + $0x70] sm:$0xff]
        %v564 = vld [vmem:[%s506 + $0x78] sm:$0xff]
        %v565 = vpack.c.bf16 %v550, %v549
        %v566 = vpack.c.bf16 %v552, %v551
        %v567 = vpack.c.bf16 %v554, %v553
        %v568 = vpack.c.bf16 %v556, %v555
        %v569 = vpack.c.bf16 %v558, %v557
        %v570 = vpack.c.bf16 %v560, %v559
        %v571 = vpack.c.bf16 %v562, %v561
        %v572 = vpack.c.bf16 %v564, %v563
        %vm573 = vcmask 523264
        %v575 = vsel %vm573, %v545, 0
        %v578 = vsel %vm573, %v546, 0
        %v581 = vsel %vm573, %v547, 0
        %v584 = vsel %vm573, %v548, 0
        %v587 = vsel %vm573, %v565, 0
        %v590 = vsel %vm573, %v566, 0
        %v593 = vsel %vm573, %v567, 0
        %v596 = vsel %vm573, %v568, 0
        %v599 = vsel %vm573, %v569, 0
        %v602 = vsel %vm573, %v570, 0
        %v605 = vsel %vm573, %v571, 0
        %v608 = vsel %vm573, %v572, 0
        %610 = vmatprep.subr.bf16.mxu0 0
        %611 = vmatpush1.bf16.xpose.msra.mxu0 %v587
        %612 = vmatprep.subr.bf16.mxu0 0
        %613 = vmatpush1.bf16.xpose.msra.mxu0 %v590
        %614 = vmatprep.subr.bf16.mxu0 0
        %615 = vmatpush1.bf16.xpose.msra.mxu0 %v593
        %616 = vmatprep.subr.bf16.mxu0 0
        %617 = vmatpush1.bf16.xpose.msra.mxu0 %v596
        %618 = vmatprep.subr.bf16.mxu0 0
        %619 = vmatpush1.bf16.xpose.msra.mxu0 %v599
        %620 = vmatprep.subr.bf16.mxu0 0
        %621 = vmatpush1.bf16.xpose.msra.mxu0 %v602
        %622 = vmatprep.subr.bf16.mxu0 0
        %623 = vmatpush1.bf16.xpose.msra.mxu0 %v605
        %624 = vmatprep.subr.bf16.mxu0 0
        %625 = vmatpush1.bf16.xpose.msra.mxu0 %v608
        %626 = vmatprep.subr.bf16.mxu0 0
        %627 = vmatpush1.bf16.xpose.msra.mxu0 0
        %628 = vmatprep.subr.bf16.mxu0 0
        %629 = vmatpush1.bf16.xpose.msra.mxu0 0
        %630 = vmatprep.subr.bf16.mxu0 0
        %631 = vmatpush1.bf16.xpose.msra.mxu0 0
        %632 = vmatprep.subr.bf16.mxu0 0
        %633 = vmatpush1.bf16.xpose.msra.mxu0 0
        %634 = vmatprep.subr.bf16.mxu0 0
        %635 = vmatpush1.bf16.xpose.msra.mxu0 0
        %636 = vmatprep.subr.bf16.mxu0 0
        %637 = vmatpush1.bf16.xpose.msra.mxu0 0
        %638 = vmatprep.subr.bf16.mxu0 0
        %639 = vmatpush1.bf16.xpose.msra.mxu0 0
        %640 = vmatprep.subr.bf16.mxu0 0
        %641 = vmatpush1.bf16.xpose.msra.mxu0 0
        %642 = vmatprep.mubr.bf16.mxu0 0
        %643 = vmatmul.mubr.bf16.gmra.mrb[0].mxu0 %v575
        %v644 = vpop.f32.mrb[0].mxu0
        %v645 = vadd.f32 %v521, %v644
        %v646 = vpop.f32.mrb[0].mxu0
        %v647 = vpop.f32.mrb[0].mxu0
        %v648 = vadd.f32 %v522, %v647
        %v649 = vpop.f32.mrb[0].mxu0
        %650 = vmatprep.mubr.bf16.mxu0 0
        %651 = vmatmul.mubr.bf16.gmra.mrb[0].mxu0 %v578
        %v652 = vpop.f32.mrb[0].mxu0
        %v653 = vadd.f32 %v523, %v652
        %v654 = vpop.f32.mrb[0].mxu0
        %v655 = vpop.f32.mrb[0].mxu0
        %v656 = vadd.f32 %v524, %v655
        %v657 = vpop.f32.mrb[0].mxu0
        %658 = vmatprep.mubr.bf16.mxu0 0
        %659 = vmatmul.mubr.bf16.gmra.mrb[0].mxu0 %v581
        %v660 = vpop.f32.mrb[0].mxu0
        %v661 = vadd.f32 %v525, %v660
        %v662 = vpop.f32.mrb[0].mxu0
        %v663 = vpop.f32.mrb[0].mxu0
        %v664 = vadd.f32 %v526, %v663
        %v665 = vpop.f32.mrb[0].mxu0
        %666 = vmatprep.mubr.bf16.mxu0 0
        %667 = vmatmul.mubr.bf16.gmra.mrb[0].mxu0 %v584
        %v668 = vpop.f32.mrb[0].mxu0
        %v669 = vadd.f32 %v527, %v668
        %v670 = vpop.f32.mrb[0].mxu0
        %v671 = vpop.f32.mrb[0].mxu0
        %v672 = vadd.f32 %v528, %v671
        %v673 = vpop.f32.mrb[0].mxu0
        %674 = vdwg.mxu0
        %675 = vmax.xlane.f32.xlu0 %v645
        %v676 = vpop.xlane.xlu0 %675
        %677 = vmax.xlane.f32.xlu0 %v648
        %v678 = vpop.xlane.xlu0 %677
        %679 = vmax.xlane.f32.xlu0 %v653
        %v680 = vpop.xlane.xlu0 %679
        %681 = vmax.xlane.f32.xlu0 %v656
        %v682 = vpop.xlane.xlu0 %681
        %683 = vmax.xlane.f32.xlu0 %v661
        %v684 = vpop.xlane.xlu0 %683
        %685 = vmax.xlane.f32.xlu0 %v664
        %v686 = vpop.xlane.xlu0 %685
        %687 = vmax.xlane.f32.xlu0 %v669
        %v688 = vpop.xlane.xlu0 %687
        %689 = vmax.xlane.f32.xlu0 %v672
        %v690 = vpop.xlane.xlu0 %689
        %v691 = vsub.f32 %v645, %v676
        %v692 = vsub.f32 %v648, %v678
        %v693 = vsub.f32 %v653, %v680
        %v694 = vsub.f32 %v656, %v682
        %v695 = vsub.f32 %v661, %v684
        %v696 = vsub.f32 %v664, %v686
        %v697 = vsub.f32 %v669, %v688
        %v698 = vsub.f32 %v672, %v690
        %v699 = vmul.f32 %v691, 1.442695
        %v700 = vpow.pop %v699
        %v701 = vmul.f32 %v692, 1.442695
        %v702 = vpow.pop %v701
        %v703 = vmul.f32 %v693, 1.442695
        %v704 = vpow.pop %v703
        %v705 = vmul.f32 %v694, 1.442695
        %v706 = vpow.pop %v705
        %v707 = vmul.f32 %v695, 1.442695
        %v708 = vpow.pop %v707
        %v709 = vmul.f32 %v696, 1.442695
        %v710 = vpow.pop %v709
        %v711 = vmul.f32 %v697, 1.442695
        %v712 = vpow.pop %v711
        %v713 = vmul.f32 %v698, 1.442695
        %v714 = vpow.pop %v713
        %715 = vadd.xlane.f32.xlu0 %v700
        %v716 = vpop.xlane.xlu0 %715
        %717 = vadd.xlane.f32.xlu0 %v702
        %v718 = vpop.xlane.xlu0 %717
        %719 = vadd.xlane.f32.xlu0 %v704
        %v720 = vpop.xlane.xlu0 %719
        %721 = vadd.xlane.f32.xlu0 %v706
        %v722 = vpop.xlane.xlu0 %721
        %723 = vadd.xlane.f32.xlu0 %v708
        %v724 = vpop.xlane.xlu0 %723
        %725 = vadd.xlane.f32.xlu0 %v710
        %v726 = vpop.xlane.xlu0 %725
        %727 = vadd.xlane.f32.xlu0 %v712
        %v728 = vpop.xlane.xlu0 %727
        %729 = vadd.xlane.f32.xlu0 %v714
        %v730 = vpop.xlane.xlu0 %729
        %v731 = vrcp.pop %v716
        %v732 = vmul.f32 100.0, %v731
        %v733 = vrcp.pop %v718
        %v734 = vmul.f32 100.0, %v733
        %v735 = vrcp.pop %v720
        %v736 = vmul.f32 100.0, %v735
        %v737 = vrcp.pop %v722
        %v738 = vmul.f32 100.0, %v737
        %v739 = vrcp.pop %v724
        %v740 = vmul.f32 100.0, %v739
        %v741 = vrcp.pop %v726
        %v742 = vmul.f32 100.0, %v741
        %v743 = vrcp.pop %v728
        %v744 = vmul.f32 100.0, %v743
        %v745 = vrcp.pop %v730
        %v746 = vmul.f32 100.0, %v745
        %v747 = vld [vmem:[%s457] sm:$0xff]
        %v748 = vld [vmem:[%s457 + $0x8] sm:$0xff]
        %v749 = vld [vmem:[%s457 + $0x10] sm:$0xff]
        %v750 = vld [vmem:[%s457 + $0x18] sm:$0xff]
        %v751 = vld [vmem:[%s457 + $0x20] sm:$0xff]
        %v752 = vld [vmem:[%s457 + $0x28] sm:$0xff]
        %v753 = vld [vmem:[%s457 + $0x30] sm:$0xff]
        %v754 = vld [vmem:[%s457 + $0x38] sm:$0xff]
        %vm755 = vcmp.ge.f32.partialorder %v747, 0.99
        %vm756 = vcmp.ge.f32.partialorder %v748, 0.99
        %vm757 = vcmp.ge.f32.partialorder %v749, 0.99
        %vm758 = vcmp.ge.f32.partialorder %v750, 0.99
        %vm759 = vcmp.ge.f32.partialorder %v751, 0.99
        %vm760 = vcmp.ge.f32.partialorder %v752, 0.99
        %vm761 = vcmp.ge.f32.partialorder %v753, 0.99
        %vm762 = vcmp.ge.f32.partialorder %v754, 0.99
        %v763 = vmul.f32 %v700, %v732
        %v764 = vmul.f32 %v702, %v734
        %v765 = vmul.f32 %v704, %v736
        %v766 = vmul.f32 %v706, %v738
        %v767 = vmul.f32 %v708, %v740
        %v768 = vmul.f32 %v710, %v742
        %v769 = vmul.f32 %v712, %v744
        %v770 = vmul.f32 %v714, %v746
        %v771 = vsel %vm755, %v763, 0.0
        %v772 = vsel %vm756, %v764, 0.0
        %v773 = vsel %vm757, %v765, 0.0
        %v774 = vsel %vm758, %v766, 0.0
        %v775 = vsel %vm759, %v767, 0.0
        %v776 = vsel %vm760, %v768, 0.0
        %v777 = vsel %vm761, %v769, 0.0
        %v778 = vsel %vm762, %v770, 0.0
        %v779 = vpack.c.bf16 %v772, %v771
        %v780 = vpack.c.bf16 %v774, %v773
        %v781 = vpack.c.bf16 %v776, %v775
        %v782 = vpack.c.bf16 %v778, %v777
        %v783 = vld [vmem:[%s511] sm:$0xff]
        %v784 = vld [vmem:[%s511 + $0x8] sm:$0xff]
        %v785 = vld [vmem:[%s511 + $0x10] sm:$0xff]
        %v786 = vld [vmem:[%s511 + $0x18] sm:$0xff]
        %v787 = vld [vmem:[%s511 + $0x20] sm:$0xff]
        %v788 = vld [vmem:[%s511 + $0x28] sm:$0xff]
        %v789 = vld [vmem:[%s511 + $0x30] sm:$0xff]
        %v790 = vld [vmem:[%s511 + $0x38] sm:$0xff]
        %v791 = vld [vmem:[%s511 + $0x40] sm:$0xff]
        %v792 = vld [vmem:[%s511 + $0x48] sm:$0xff]
        %v793 = vld [vmem:[%s511 + $0x50] sm:$0xff]
        %v794 = vld [vmem:[%s511 + $0x58] sm:$0xff]
        %v795 = vld [vmem:[%s511 + $0x60] sm:$0xff]
        %v796 = vld [vmem:[%s511 + $0x68] sm:$0xff]
        %v797 = vld [vmem:[%s511 + $0x70] sm:$0xff]
        %v798 = vld [vmem:[%s511 + $0x78] sm:$0xff]
        %v799 = vpack.c.bf16 %v784, %v783
        %v800 = vpack.c.bf16 %v786, %v785
        %v801 = vpack.c.bf16 %v788, %v787
        %v802 = vpack.c.bf16 %v790, %v789
        %v803 = vpack.c.bf16 %v792, %v791
        %v804 = vpack.c.bf16 %v794, %v793
        %v805 = vpack.c.bf16 %v796, %v795
        %v806 = vpack.c.bf16 %v798, %v797
        %807 = vmatprep.subr.bf16.mxu0 0
        %808 = vmatpush1.bf16.msra.mxu0 %v799
        %809 = vmatprep.subr.bf16.mxu0 0
        %810 = vmatpush1.bf16.msra.mxu0 %v800
        %811 = vmatprep.subr.bf16.mxu0 0
        %812 = vmatpush1.bf16.msra.mxu0 %v801
        %813 = vmatprep.subr.bf16.mxu0 0
        %814 = vmatpush1.bf16.msra.mxu0 %v802
        %815 = vmatprep.subr.bf16.mxu0 0
        %816 = vmatpush1.bf16.msra.mxu0 %v803
        %817 = vmatprep.subr.bf16.mxu0 0
        %818 = vmatpush1.bf16.msra.mxu0 %v804
        %819 = vmatprep.subr.bf16.mxu0 0
        %820 = vmatpush1.bf16.msra.mxu0 %v805
        %821 = vmatprep.subr.bf16.mxu0 0
        %822 = vmatpush1.bf16.msra.mxu0 %v806
        %823 = vmatprep.subr.bf16.mxu0 0
        %824 = vmatpush1.bf16.msra.mxu0 0
        %825 = vmatprep.subr.bf16.mxu0 0
        %826 = vmatpush1.bf16.msra.mxu0 0
        %827 = vmatprep.subr.bf16.mxu0 0
        %828 = vmatpush1.bf16.msra.mxu0 0
        %829 = vmatprep.subr.bf16.mxu0 0
        %830 = vmatpush1.bf16.msra.mxu0 0
        %831 = vmatprep.subr.bf16.mxu0 0
        %832 = vmatpush1.bf16.msra.mxu0 0
        %833 = vmatprep.subr.bf16.mxu0 0
        %834 = vmatpush1.bf16.msra.mxu0 0
        %835 = vmatprep.subr.bf16.mxu0 0
        %836 = vmatpush1.bf16.msra.mxu0 0
        %837 = vmatprep.subr.bf16.mxu0 0
        %838 = vmatpush1.bf16.msra.mxu0 0
        %839 = vmatprep.mubr.bf16.mxu0 0
        %840 = vmatmul.mubr.bf16.gmra.mrb[0].mxu0 %v779
        %v841 = vpop.f32.mrb[0].mxu0
        %v842 = vadd.f32 0.0, %v841
        %v843 = vpop.f32.mrb[0].mxu0
        %v844 = vpop.f32.mrb[0].mxu0
        %v845 = vadd.f32 0.0, %v844
        %v846 = vpop.f32.mrb[0].mxu0
        %847 = vmatprep.mubr.bf16.mxu0 0
        %848 = vmatmul.mubr.bf16.gmra.mrb[0].mxu0 %v780
        %v849 = vpop.f32.mrb[0].mxu0
        %v850 = vadd.f32 0.0, %v849
        %v851 = vpop.f32.mrb[0].mxu0
        %v852 = vpop.f32.mrb[0].mxu0
        %v853 = vadd.f32 0.0, %v852
        %v854 = vpop.f32.mrb[0].mxu0
        %855 = vmatprep.mubr.bf16.mxu0 0
        %856 = vmatmul.mubr.bf16.gmra.mrb[0].mxu0 %v781
        %v857 = vpop.f32.mrb[0].mxu0
        %v858 = vadd.f32 0.0, %v857
        %v859 = vpop.f32.mrb[0].mxu0
        %v860 = vpop.f32.mrb[0].mxu0
        %v861 = vadd.f32 0.0, %v860
        %v862 = vpop.f32.mrb[0].mxu0
        %863 = vmatprep.mubr.bf16.mxu0 0
        %864 = vmatmul.mubr.bf16.gmra.mrb[0].mxu0 %v782
        %v865 = vpop.f32.mrb[0].mxu0
        %v866 = vadd.f32 0.0, %v865
        %v867 = vpop.f32.mrb[0].mxu0
        %v868 = vpop.f32.mrb[0].mxu0
        %v869 = vadd.f32 0.0, %v868
        %v870 = vpop.f32.mrb[0].mxu0
        %871 = vdwg.mxu0
        %s872 = scalar_lea.vmem %s450, 64 [#allocation2]
        %v873 = vld [vmem:[%s872] sm:$0xff]
        %v874 = vld [vmem:[%s872 + $0x8] sm:$0xff]
        %v875 = vld [vmem:[%s872 + $0x10] sm:$0xff]
        %v876 = vld [vmem:[%s872 + $0x18] sm:$0xff]
        %v877 = vld [vmem:[%s872 + $0x20] sm:$0xff]
        %v878 = vld [vmem:[%s872 + $0x28] sm:$0xff]
        %v879 = vld [vmem:[%s872 + $0x30] sm:$0xff]
        %v880 = vld [vmem:[%s872 + $0x38] sm:$0xff]
        %v881 = vmul.f32 %v873, 0.125
        %v882 = vmul.f32 %v874, 0.125
        %v883 = vmul.f32 %v875, 0.125
        %v884 = vmul.f32 %v876, 0.125
        %v885 = vmul.f32 %v877, 0.125
        %v886 = vmul.f32 %v878, 0.125
        %v887 = vmul.f32 %v879, 0.125
        %v888 = vmul.f32 %v880, 0.125
        %v889 = vpack.c.bf16 %v882, %v881
        %v890 = vpack.c.bf16 %v884, %v883
        %v891 = vpack.c.bf16 %v886, %v885
        %v892 = vpack.c.bf16 %v888, %v887
        %s893 = scalar_lea.vmem %s506, 128
        %v894 = vld [vmem:[%s893] sm:$0xff]
        %v895 = vld [vmem:[%s893 + $0x8] sm:$0xff]
        %v896 = vld [vmem:[%s893 + $0x10] sm:$0xff]
        %v897 = vld [vmem:[%s893 + $0x18] sm:$0xff]
        %v898 = vld [vmem:[%s893 + $0x20] sm:$0xff]
        %v899 = vld [vmem:[%s893 + $0x28] sm:$0xff]
        %v900 = vld [vmem:[%s893 + $0x30] sm:$0xff]
        %v901 = vld [vmem:[%s893 + $0x38] sm:$0xff]
        %v902 = vld [vmem:[%s893 + $0x40] sm:$0xff]
        %v903 = vld [vmem:[%s893 + $0x48] sm:$0xff]
        %v904 = vld [vmem:[%s893 + $0x50] sm:$0xff]
        %v905 = vld [vmem:[%s893 + $0x58] sm:$0xff]
        %v906 = vld [vmem:[%s893 + $0x60] sm:$0xff]
        %v907 = vld [vmem:[%s893 + $0x68] sm:$0xff]
        %v908 = vld [vmem:[%s893 + $0x70] sm:$0xff]
        %v909 = vld [vmem:[%s893 + $0x78] sm:$0xff]
        %v910 = vpack.c.bf16 %v895, %v894
        %v911 = vpack.c.bf16 %v897, %v896
        %v912 = vpack.c.bf16 %v899, %v898
        %v913 = vpack.c.bf16 %v901, %v900
        %v914 = vpack.c.bf16 %v903, %v902
        %v915 = vpack.c.bf16 %v905, %v904
        %v916 = vpack.c.bf16 %v907, %v906
        %v917 = vpack.c.bf16 %v909, %v908
        %v919 = vsel %vm573, %v889, 0
        %v922 = vsel %vm573, %v890, 0
        %v925 = vsel %vm573, %v891, 0
        %v928 = vsel %vm573, %v892, 0
        %v931 = vsel %vm573, %v910, 0
        %v934 = vsel %vm573, %v911, 0
        %v937 = vsel %vm573, %v912, 0
        %v940 = vsel %vm573, %v913, 0
        %v943 = vsel %vm573, %v914, 0
        %v946 = vsel %vm573, %v915, 0
        %v949 = vsel %vm573, %v916, 0
        %v952 = vsel %vm573, %v917, 0
        %954 = vmatprep.subr.bf16.mxu0 0
        %955 = vmatpush1.bf16.xpose.msra.mxu0 %v931
        %956 = vmatprep.subr.bf16.mxu0 0
        %957 = vmatpush1.bf16.xpose.msra.mxu0 %v934
        %958 = vmatprep.subr.bf16.mxu0 0
        %959 = vmatpush1.bf16.xpose.msra.mxu0 %v937
        %960 = vmatprep.subr.bf16.mxu0 0
        %961 = vmatpush1.bf16.xpose.msra.mxu0 %v940
        %962 = vmatprep.subr.bf16.mxu0 0
        %963 = vmatpush1.bf16.xpose.msra.mxu0 %v943
        %964 = vmatprep.subr.bf16.mxu0 0
        %965 = vmatpush1.bf16.xpose.msra.mxu0 %v946
        %966 = vmatprep.subr.bf16.mxu0 0
        %967 = vmatpush1.bf16.xpose.msra.mxu0 %v949
        %968 = vmatprep.subr.bf16.mxu0 0
        %969 = vmatpush1.bf16.xpose.msra.mxu0 %v952
        %970 = vmatprep.subr.bf16.mxu0 0
        %971 = vmatpush1.bf16.xpose.msra.mxu0 0
        %972 = vmatprep.subr.bf16.mxu0 0
        %973 = vmatpush1.bf16.xpose.msra.mxu0 0
        %974 = vmatprep.subr.bf16.mxu0 0
        %975 = vmatpush1.bf16.xpose.msra.mxu0 0
        %976 = vmatprep.subr.bf16.mxu0 0
        %977 = vmatpush1.bf16.xpose.msra.mxu0 0
        %978 = vmatprep.subr.bf16.mxu0 0
        %979 = vmatpush1.bf16.xpose.msra.mxu0 0
        %980 = vmatprep.subr.bf16.mxu0 0
        %981 = vmatpush1.bf16.xpose.msra.mxu0 0
        %982 = vmatprep.subr.bf16.mxu0 0
        %983 = vmatpush1.bf16.xpose.msra.mxu0 0
        %984 = vmatprep.subr.bf16.mxu0 0
        %985 = vmatpush1.bf16.xpose.msra.mxu0 0
        %986 = vmatprep.mubr.bf16.mxu0 0
        %987 = vmatmul.mubr.bf16.gmra.mrb[0].mxu0 %v919
        %v988 = vpop.f32.mrb[0].mxu0
        %v989 = vadd.f32 %v521, %v988
        %v990 = vpop.f32.mrb[0].mxu0
        %v991 = vpop.f32.mrb[0].mxu0
        %v992 = vadd.f32 %v522, %v991
        %v993 = vpop.f32.mrb[0].mxu0
        %994 = vmatprep.mubr.bf16.mxu0 0
        %995 = vmatmul.mubr.bf16.gmra.mrb[0].mxu0 %v922
        %v996 = vpop.f32.mrb[0].mxu0
        %v997 = vadd.f32 %v523, %v996
        %v998 = vpop.f32.mrb[0].mxu0
        %v999 = vpop.f32.mrb[0].mxu0
        %v1000 = vadd.f32 %v524, %v999
        %v1001 = vpop.f32.mrb[0].mxu0
        %1002 = vmatprep.mubr.bf16.mxu0 0
        %1003 = vmatmul.mubr.bf16.gmra.mrb[0].mxu0 %v925
        %v1004 = vpop.f32.mrb[0].mxu0
        %v1005 = vadd.f32 %v525, %v1004
        %v1006 = vpop.f32.mrb[0].mxu0
        %v1007 = vpop.f32.mrb[0].mxu0
        %v1008 = vadd.f32 %v526, %v1007
        %v1009 = vpop.f32.mrb[0].mxu0
        %1010 = vmatprep.mubr.bf16.mxu0 0
        %1011 = vmatmul.mubr.bf16.gmra.mrb[0].mxu0 %v928
        %v1012 = vpop.f32.mrb[0].mxu0
        %v1013 = vadd.f32 %v527, %v1012
        %v1014 = vpop.f32.mrb[0].mxu0
        %v1015 = vpop.f32.mrb[0].mxu0
        %v1016 = vadd.f32 %v528, %v1015
        %v1017 = vpop.f32.mrb[0].mxu0
        %1018 = vdwg.mxu0
        %1019 = vmax.xlane.f32.xlu0 %v989
        %v1020 = vpop.xlane.xlu0 %1019
        %1021 = vmax.xlane.f32.xlu0 %v992
        %v1022 = vpop.xlane.xlu0 %1021
        %1023 = vmax.xlane.f32.xlu0 %v997
        %v1024 = vpop.xlane.xlu0 %1023
        %1025 = vmax.xlane.f32.xlu0 %v1000
        %v1026 = vpop.xlane.xlu0 %1025
        %1027 = vmax.xlane.f32.xlu0 %v1005
        %v1028 = vpop.xlane.xlu0 %1027
        %1029 = vmax.xlane.f32.xlu0 %v1008
        %v1030 = vpop.xlane.xlu0 %1029
        %1031 = vmax.xlane.f32.xlu0 %v1013
        %v1032 = vpop.xlane.xlu0 %1031
        %1033 = vmax.xlane.f32.xlu0 %v1016
        %v1034 = vpop.xlane.xlu0 %1033
        %v1035 = vsub.f32 %v989, %v1020
        %v1036 = vsub.f32 %v992, %v1022
        %v1037 = vsub.f32 %v997, %v1024
        %v1038 = vsub.f32 %v1000, %v1026
        %v1039 = vsub.f32 %v1005, %v1028
        %v1040 = vsub.f32 %v1008, %v1030
        %v1041 = vsub.f32 %v1013, %v1032
        %v1042 = vsub.f32 %v1016, %v1034
        %v1043 = vmul.f32 %v1035, 1.442695
        %v1044 = vpow.pop %v1043
        %v1045 = vmul.f32 %v1036, 1.442695
        %v1046 = vpow.pop %v1045
        %v1047 = vmul.f32 %v1037, 1.442695
        %v1048 = vpow.pop %v1047
        %v1049 = vmul.f32 %v1038, 1.442695
        %v1050 = vpow.pop %v1049
        %v1051 = vmul.f32 %v1039, 1.442695
        %v1052 = vpow.pop %v1051
        %v1053 = vmul.f32 %v1040, 1.442695
        %v1054 = vpow.pop %v1053
        %v1055 = vmul.f32 %v1041, 1.442695
        %v1056 = vpow.pop %v1055
        %v1057 = vmul.f32 %v1042, 1.442695
        %v1058 = vpow.pop %v1057
        %1059 = vadd.xlane.f32.xlu0 %v1044
        %v1060 = vpop.xlane.xlu0 %1059
        %1061 = vadd.xlane.f32.xlu0 %v1046
        %v1062 = vpop.xlane.xlu0 %1061
        %1063 = vadd.xlane.f32.xlu0 %v1048
        %v1064 = vpop.xlane.xlu0 %1063
        %1065 = vadd.xlane.f32.xlu0 %v1050
        %v1066 = vpop.xlane.xlu0 %1065
        %1067 = vadd.xlane.f32.xlu0 %v1052
        %v1068 = vpop.xlane.xlu0 %1067
        %1069 = vadd.xlane.f32.xlu0 %v1054
        %v1070 = vpop.xlane.xlu0 %1069
        %1071 = vadd.xlane.f32.xlu0 %v1056
        %v1072 = vpop.xlane.xlu0 %1071
        %1073 = vadd.xlane.f32.xlu0 %v1058
        %v1074 = vpop.xlane.xlu0 %1073
        %v1075 = vrcp.pop %v1060
        %v1076 = vmul.f32 100.0, %v1075
        %v1077 = vrcp.pop %v1062
        %v1078 = vmul.f32 100.0, %v1077
        %v1079 = vrcp.pop %v1064
        %v1080 = vmul.f32 100.0, %v1079
        %v1081 = vrcp.pop %v1066
        %v1082 = vmul.f32 100.0, %v1081
        %v1083 = vrcp.pop %v1068
        %v1084 = vmul.f32 100.0, %v1083
        %v1085 = vrcp.pop %v1070
        %v1086 = vmul.f32 100.0, %v1085
        %v1087 = vrcp.pop %v1072
        %v1088 = vmul.f32 100.0, %v1087
        %v1089 = vrcp.pop %v1074
        %v1090 = vmul.f32 100.0, %v1089
        %s1091 = scalar_lea.vmem %s457, 64 [#allocation3]
        %v1092 = vld [vmem:[%s1091] sm:$0xff]
        %v1093 = vld [vmem:[%s1091 + $0x8] sm:$0xff]
        %v1094 = vld [vmem:[%s1091 + $0x10] sm:$0xff]
        %v1095 = vld [vmem:[%s1091 + $0x18] sm:$0xff]
        %v1096 = vld [vmem:[%s1091 + $0x20] sm:$0xff]
        %v1097 = vld [vmem:[%s1091 + $0x28] sm:$0xff]
        %v1098 = vld [vmem:[%s1091 + $0x30] sm:$0xff]
        %v1099 = vld [vmem:[%s1091 + $0x38] sm:$0xff]
        %vm1100 = vcmp.ge.f32.partialorder %v1092, 0.99
        %vm1101 = vcmp.ge.f32.partialorder %v1093, 0.99
        %vm1102 = vcmp.ge.f32.partialorder %v1094, 0.99
        %vm1103 = vcmp.ge.f32.partialorder %v1095, 0.99
        %vm1104 = vcmp.ge.f32.partialorder %v1096, 0.99
        %vm1105 = vcmp.ge.f32.partialorder %v1097, 0.99
        %vm1106 = vcmp.ge.f32.partialorder %v1098, 0.99
        %vm1107 = vcmp.ge.f32.partialorder %v1099, 0.99
        %v1108 = vmul.f32 %v1044, %v1076
        %v1109 = vmul.f32 %v1046, %v1078
        %v1110 = vmul.f32 %v1048, %v1080
        %v1111 = vmul.f32 %v1050, %v1082
        %v1112 = vmul.f32 %v1052, %v1084
        %v1113 = vmul.f32 %v1054, %v1086
        %v1114 = vmul.f32 %v1056, %v1088
        %v1115 = vmul.f32 %v1058, %v1090
        %v1116 = vsel %vm1100, %v1108, 0.0
        %v1117 = vsel %vm1101, %v1109, 0.0
        %v1118 = vsel %vm1102, %v1110, 0.0
        %v1119 = vsel %vm1103, %v1111, 0.0
        %v1120 = vsel %vm1104, %v1112, 0.0
        %v1121 = vsel %vm1105, %v1113, 0.0
        %v1122 = vsel %vm1106, %v1114, 0.0
        %v1123 = vsel %vm1107, %v1115, 0.0
        %v1124 = vpack.c.bf16 %v1117, %v1116
        %v1125 = vpack.c.bf16 %v1119, %v1118
        %v1126 = vpack.c.bf16 %v1121, %v1120
        %v1127 = vpack.c.bf16 %v1123, %v1122
        %s1128 = scalar_lea.vmem %s511, 128
        %v1129 = vld [vmem:[%s1128] sm:$0xff]
        %v1130 = vld [vmem:[%s1128 + $0x8] sm:$0xff]
        %v1131 = vld [vmem:[%s1128 + $0x10] sm:$0xff]
        %v1132 = vld [vmem:[%s1128 + $0x18] sm:$0xff]
        %v1133 = vld [vmem:[%s1128 + $0x20] sm:$0xff]
        %v1134 = vld [vmem:[%s1128 + $0x28] sm:$0xff]
        %v1135 = vld [vmem:[%s1128 + $0x30] sm:$0xff]
        %v1136 = vld [vmem:[%s1128 + $0x38] sm:$0xff]
        %v1137 = vld [vmem:[%s1128 + $0x40] sm:$0xff]
        %v1138 = vld [vmem:[%s1128 + $0x48] sm:$0xff]
        %v1139 = vld [vmem:[%s1128 + $0x50] sm:$0xff]
        %v1140 = vld [vmem:[%s1128 + $0x58] sm:$0xff]
        %v1141 = vld [vmem:[%s1128 + $0x60] sm:$0xff]
        %v1142 = vld [vmem:[%s1128 + $0x68] sm:$0xff]
        %v1143 = vld [vmem:[%s1128 + $0x70] sm:$0xff]
        %v1144 = vld [vmem:[%s1128 + $0x78] sm:$0xff]
        %v1145 = vpack.c.bf16 %v1130, %v1129
        %v1146 = vpack.c.bf16 %v1132, %v1131
        %v1147 = vpack.c.bf16 %v1134, %v1133
        %v1148 = vpack.c.bf16 %v1136, %v1135
        %v1149 = vpack.c.bf16 %v1138, %v1137
        %v1150 = vpack.c.bf16 %v1140, %v1139
        %v1151 = vpack.c.bf16 %v1142, %v1141
        %v1152 = vpack.c.bf16 %v1144, %v1143
        %1153 = vmatprep.subr.bf16.mxu0 0
        %1154 = vmatpush1.bf16.msra.mxu0 %v1145
        %1155 = vmatprep.subr.bf16.mxu0 0
        %1156 = vmatpush1.bf16.msra.mxu0 %v1146
        %1157 = vmatprep.subr.bf16.mxu0 0
        %1158 = vmatpush1.bf16.msra.mxu0 %v1147
        %1159 = vmatprep.subr.bf16.mxu0 0
        %1160 = vmatpush1.bf16.msra.mxu0 %v1148
        %1161 = vmatprep.subr.bf16.mxu0 0
        %1162 = vmatpush1.bf16.msra.mxu0 %v1149
        %1163 = vmatprep.subr.bf16.mxu0 0
        %1164 = vmatpush1.bf16.msra.mxu0 %v1150
        %1165 = vmatprep.subr.bf16.mxu0 0
        %1166 = vmatpush1.bf16.msra.mxu0 %v1151
        %1167 = vmatprep.subr.bf16.mxu0 0
        %1168 = vmatpush1.bf16.msra.mxu0 %v1152
        %1169 = vmatprep.subr.bf16.mxu0 0
        %1170 = vmatpush1.bf16.msra.mxu0 0
        %1171 = vmatprep.subr.bf16.mxu0 0
        %1172 = vmatpush1.bf16.msra.mxu0 0
        %1173 = vmatprep.subr.bf16.mxu0 0
        %1174 = vmatpush1.bf16.msra.mxu0 0
        %1175 = vmatprep.subr.bf16.mxu0 0
        %1176 = vmatpush1.bf16.msra.mxu0 0
        %1177 = vmatprep.subr.bf16.mxu0 0
        %1178 = vmatpush1.bf16.msra.mxu0 0
        %1179 = vmatprep.subr.bf16.mxu0 0
        %1180 = vmatpush1.bf16.msra.mxu0 0
        %1181 = vmatprep.subr.bf16.mxu0 0
        %1182 = vmatpush1.bf16.msra.mxu0 0
        %1183 = vmatprep.subr.bf16.mxu0 0
        %1184 = vmatpush1.bf16.msra.mxu0 0
        %1185 = vmatprep.mubr.bf16.mxu0 0
        %1186 = vmatmul.mubr.bf16.gmra.mrb[0].mxu0 %v1124
        %v1187 = vpop.f32.mrb[0].mxu0
        %v1188 = vadd.f32 0.0, %v1187
        %v1189 = vpop.f32.mrb[0].mxu0
        %v1190 = vpop.f32.mrb[0].mxu0
        %v1191 = vadd.f32 0.0, %v1190
        %v1192 = vpop.f32.mrb[0].mxu0
        %1193 = vmatprep.mubr.bf16.mxu0 0
        %1194 = vmatmul.mubr.bf16.gmra.mrb[0].mxu0 %v1125
        %v1195 = vpop.f32.mrb[0].mxu0
        %v1196 = vadd.f32 0.0, %v1195
        %v1197 = vpop.f32.mrb[0].mxu0
        %v1198 = vpop.f32.mrb[0].mxu0
        %v1199 = vadd.f32 0.0, %v1198
        %v1200 = vpop.f32.mrb[0].mxu0
        %1201 = vmatprep.mubr.bf16.mxu0 0
        %1202 = vmatmul.mubr.bf16.gmra.mrb[0].mxu0 %v1126
        %v1203 = vpop.f32.mrb[0].mxu0
        %v1204 = vadd.f32 0.0, %v1203
        %v1205 = vpop.f32.mrb[0].mxu0
        %v1206 = vpop.f32.mrb[0].mxu0
        %v1207 = vadd.f32 0.0, %v1206
        %v1208 = vpop.f32.mrb[0].mxu0
        %1209 = vmatprep.mubr.bf16.mxu0 0
        %1210 = vmatmul.mubr.bf16.gmra.mrb[0].mxu0 %v1127
        %v1211 = vpop.f32.mrb[0].mxu0
        %v1212 = vadd.f32 0.0, %v1211
        %v1213 = vpop.f32.mrb[0].mxu0
        %v1214 = vpop.f32.mrb[0].mxu0
        %v1215 = vadd.f32 0.0, %v1214
        %v1216 = vpop.f32.mrb[0].mxu0
        %1217 = vdwg.mxu0
        %1226 = vrot.lane.b32.xlu0 %v1188, 64
        %v1227 = vpop.permute.xlu0 %1226
        %1228 = vrot.lane.b32.xlu0 %v1191, 64
        %v1229 = vpop.permute.xlu0 %1228
        %1230 = vrot.lane.b32.xlu0 %v1196, 64
        %v1231 = vpop.permute.xlu0 %1230
        %1232 = vrot.lane.b32.xlu0 %v1199, 64
        %v1233 = vpop.permute.xlu0 %1232
        %1234 = vrot.lane.b32.xlu0 %v1204, 64
        %v1235 = vpop.permute.xlu0 %1234
        %1236 = vrot.lane.b32.xlu0 %v1207, 64
        %v1237 = vpop.permute.xlu0 %1236
        %1238 = vrot.lane.b32.xlu0 %v1212, 64
        %v1239 = vpop.permute.xlu0 %1238
        %1240 = vrot.lane.b32.xlu0 %v1215, 64
        %v1241 = vpop.permute.xlu0 %1240
        %v1250 = vsel %vm573, %v842, %v1227
        %v1251 = vsel %vm573, %v845, %v1229
        %v1252 = vsel %vm573, %v850, %v1231
        %v1253 = vsel %vm573, %v853, %v1233
        %v1254 = vsel %vm573, %v858, %v1235
        %v1255 = vsel %vm573, %v861, %v1237
        %v1256 = vsel %vm573, %v866, %v1239
        %v1257 = vsel %vm573, %v869, %v1241
        %1258 = vst [vmem:[%s500] sm:$0xff] %v1250
        %1259 = vst [vmem:[%s500 + $0x8] sm:$0xff] %v1251
        %1260 = vst [vmem:[%s500 + $0x10] sm:$0xff] %v1252
        %1261 = vst [vmem:[%s500 + $0x18] sm:$0xff] %v1253
        %1262 = vst [vmem:[%s500 + $0x20] sm:$0xff] %v1254
        %1263 = vst [vmem:[%s500 + $0x28] sm:$0xff] %v1255
        %1264 = vst [vmem:[%s500 + $0x30] sm:$0xff] %v1256
        %1265 = vst [vmem:[%s500 + $0x38] sm:$0xff] %v1257
        %s1266 = sand.u32 %s175, 1
        %s1267 = scalar_lea.sflag [#allocation5], %s1266
        %s1268 = sand.u32 %s175, 1
        %s1269 = smul.addr %s1268, 64
        %s1270 = scalar_lea.vmem [#allocation4], %s1269
        // Predicated region
        $region117: #{tpu_custom_call.1} parent=107 // pred_check
          %p1271 = pneg %p185
        $region118: #{tpu_custom_call.1} parent=107 // pred_check_branch
          %1273 = sbr.rel (%p1271) target = $region120
        $region119: #{tpu_custom_call.1} parent=107 // pred_region
          %s1274 = smul.u32 8, %s24
          %s1276 = ssub.s32 1024, 1024
          %1277 = vsyncadd %s1267, %s1276
          %s1278 = smul.addr %s23, 16
          %s1279 = sadd.s32 %s1274, %s1278
          %s1280 = smul.addr %s1279, 128
          %s1281 = scalar_lea.hbm %s5, %s1280
          %s1282 = sshll.u32 %s1270, 4
          %s1283 = int_to_ptr.vmem [resolvable:$true] %s1282
          %1288 = dma.vmem_to_hbm [thread:$0]  %s1283, 1024, %s1281, %s1267, 128, 128, 8
        $region120: #{tpu_custom_call.1} parent=107 // pred_fallthru
          _
      $region108: #{tpu_custom_call.1} parent=5 // pred_fallthru
        _
      %p1289 = scmp.le.s32.totalorder 2, %s14
      // Predicated region
      $region121: #{tpu_custom_call.1} parent=5 // pred_check
        %p1290 = pneg %p1289
      $region122: #{tpu_custom_call.1} parent=5 // pred_check_branch
        %1292 = sbr.rel (%p1290) target = $region124
      $region123: #{tpu_custom_call.1} parent=5 // pred_region
        %s1293 = ssub.s32 %s14, 2
        // Predicated region
        $region125: #{tpu_custom_call.1} parent=123 // pred_check
          %p1294 = pneg %p191
        $region126: #{tpu_custom_call.1} parent=123 // pred_check_branch
          %1296 = sbr.rel (%p1294) target = $region128
        $region127: #{tpu_custom_call.1} parent=123 // pred_region
          %s1297 = sand.u32 %s176, 1
          %s1298 = scalar_lea.sflag [#allocation5], %s1297
          %s1299 = sand.u32 %s176, 1
          %s1300 = smul.addr %s1299, 64
          %s1301 = scalar_lea.vmem [#allocation4], %s1300
          %1302 = dma.done %s1298, 1024
        $region128: #{tpu_custom_call.1} parent=123 // pred_fallthru
          _
      $region124: #{tpu_custom_call.1} parent=5 // pred_fallthru
        _
    $region6: #{tpu_custom_call.1} parent=1 // loop_footer
      %s18 = sadd.s32 1, %s14
    $region7: #{tpu_custom_call.1} parent=1 // loop_footer_branch
      %13 = sbr.rel target = $region3
    $region8: #{tpu_custom_call.1} parent=1 // loop_exit
      _
    %1303 = vsyncpa [#allocation5], 1
    %s1304 = scalar_lea.sflag [#allocation5], 1
    %1305 = vsyncpa %s1304, 1

</llo_original>
